<compile_context>
chip_gen: v5e
topology: v5e:2x2
jax: 0.10.0
libtpu: 0.0.40
codegen_flags: <defaults>
</compile_context>

<pallas_src>
import functools

import jax
import jax.numpy as jnp
from jax.experimental import pallas as pl
from jax.experimental.pallas import tpu as pltpu

EPS = 1e-6
VN_SLOPE = 0.2      # VNLeakyReLU negative_slope
LRELU_SLOPE = 0.01  # torch.nn.LeakyReLU default


def _round_up(x, m):
    return (x + m - 1) // m * m


def _block_diag3(w):
    """3-way block-diagonal expansion: (K, N) -> (3K, 3N)."""
    z = jnp.zeros_like(w)
    return jnp.concatenate(
        [jnp.concatenate([w, z, z], axis=1),
         jnp.concatenate([z, w, z], axis=1),
         jnp.concatenate([z, z, w], axis=1)], axis=0)


def frontier_kernel(sca_ref, vec_ref,
                    w1_ref, w12_ref, wsn1_ref, wss1_ref, wg3_ref, bg3_ref,
                    wd_ref, w1b_ref, wsn2_ref, wss2_ref,
                    out_ref):
    f32 = jnp.float32
    bf16 = jnp.bfloat16
    DH1 = wsn1_ref.shape[0]            # dh1 per component
    HV = wd_ref.shape[0] // 3          # hidden vector channels per component
    DH2 = wsn2_ref.shape[0]            # dh2 per component

    sca = sca_ref[...]                 # (T, S)   bf16
    v = vec_ref[...]                   # (T, 3V)  bf16, lanes = [x | y | z]

    # ---------------- Layer 1: GVLinear (lane-packed, block-diag weights) ----------------
    i_all = jnp.dot(v, w1_ref[...], preferred_element_type=f32)            # (T, 3*DH1)
    ix, iy, iz = i_all[:, :DH1], i_all[:, DH1:2 * DH1], i_all[:, 2 * DH1:]
    norm1 = jnp.sqrt(ix * ix + iy * iy + iz * iz)                          # (T, DH1) f32

    # lin_scalar on cat([norm, sca]) as a split matmul (weight pre-split in init).
    out_s = (jnp.dot(norm1.astype(bf16), wsn1_ref[...], preferred_element_type=f32) +
             jnp.dot(sca, wss1_ref[...], preferred_element_type=f32))      # (T, HS)

    # Fused lin_vector @ lin_vector2 (w12) applied straight to the input vectors.
    o_all = jnp.dot(v, w12_ref[...], preferred_element_type=f32)           # (T, 3*HV)

    # Gate weights pre-tiled to 3*HV outputs -> gate lands directly on all 3 components.
    gate3 = jax.nn.sigmoid(
        jnp.dot(out_s.astype(bf16), wg3_ref[...], preferred_element_type=f32)
        + bg3_ref[...])                                                    # (T, 3*HV) f32
    og_all = o_all * gate3

    # ---------------- Layer 1 activations ----------------
    # VNLeakyReLU on the vector channels: a = x - (1-slope)*[dot<0]*(dot/(|d|^2+eps))*d
    d_all = jnp.dot(og_all.astype(bf16), wd_ref[...], preferred_element_type=f32)  # (T, 3*HV)
    ox, oy, oz = og_all[:, :HV], og_all[:, HV:2 * HV], og_all[:, 2 * HV:]
    dx, dy, dz = d_all[:, :HV], d_all[:, HV:2 * HV], d_all[:, 2 * HV:]
    dotv = ox * dx + oy * dy + oz * dz                                     # (T, HV)
    dnsq = dx * dx + dy * dy + dz * dz
    coef = dotv * pl.reciprocal(dnsq + EPS, approx=True)                   # divide -> EUP
    c = (1.0 - VN_SLOPE) * jnp.where(dotv >= 0, 0.0, coef)                 # (T, HV)
    c3 = jnp.concatenate((c, c, c), axis=1)                                # (T, 3*HV) small
    a_all = og_all - c3 * d_all

    # LeakyReLU on the scalar channels.
    sca1 = jnp.where(out_s >= 0, out_s, LRELU_SLOPE * out_s)               # (T, HS)

    # ---------------- Layer 2: GVLinear, scalar branch only ----------------
    j_all = jnp.dot(a_all.astype(bf16), w1b_ref[...], preferred_element_type=f32)  # (T, 3*DH2)
    jx, jy, jz = j_all[:, :DH2], j_all[:, DH2:2 * DH2], j_all[:, 2 * DH2:]
    norm2 = jnp.sqrt(jx * jx + jy * jy + jz * jz)                          # (T, DH2)

    # Final head matmuls stay f32: tiny, no casts, keeps the output accurate near zero.
    pred = (jnp.dot(norm2, wsn2_ref[...], preferred_element_type=f32) +
            jnp.dot(sca1, wss2_ref[...], preferred_element_type=f32))      # (T, 1)
    out_ref[...] = pred
    # TODO(synk): a lane-dense (1, tile_m) output block would remove the masked vst.msk
    #             stores here; the win is modest vs. the in-kernel transpose it needs.


def init_params(key, in_sca, in_vec, hid_sca, hid_vec):
    """Deterministic synthetic parameters (PyTorch-Linear-style uniform init).
    Returns math-layout f32 weights (already transposed / pre-split)."""
    dh1 = max(in_vec, hid_vec)
    dh2 = max(hid_vec, 1)

    def lin(k, fan_in, shape):
        bound = 1.0 / jnp.sqrt(jnp.float32(fan_in))
        return jax.random.uniform(k, shape, jnp.float32, -bound, bound)

    ks = jax.random.split(key, 8)
    # Layer 1: GVLinear(in_sca, in_vec, hid_sca, hid_vec)
    wv1a = lin(ks[0], in_vec, (dh1, in_vec))                 # lin_vector
    wv2a = lin(ks[1], dh1, (hid_vec, dh1))                   # lin_vector2
    ws1 = lin(ks[2], dh1 + in_sca, (hid_sca, dh1 + in_sca))  # lin_scalar (cat [norm, sca])
    wg1 = lin(ks[3], hid_sca, (hid_vec, hid_sca))            # scalar_to_vector_gates.weight
    bg1 = lin(ks[4], hid_sca, (hid_vec,))                    # scalar_to_vector_gates.bias
    wd1 = lin(ks[5], hid_vec, (hid_vec, hid_vec))            # VNLeakyReLU.map_to_dir
    # Layer 2: GVLinear(hid_sca, hid_vec, 1, 1)
    wv1b = lin(ks[6], hid_vec, (dh2, hid_vec))
    ws2 = lin(ks[7], dh2 + hid_sca, (1, dh2 + hid_sca))

    return (
        wv1a.T,                      # (in_vec, dh1)
        wv2a.T,                      # (dh1, hid_vec)
        ws1[:, :dh1].T,              # (dh1, hid_sca)    norm part
        ws1[:, dh1:].T,              # (in_sca, hid_sca) scalar part
        wg1.T,                       # (hid_sca, hid_vec)
        bg1.reshape(1, hid_vec),     # (1, hid_vec)
        wd1.T,                       # (hid_vec, hid_vec)
        wv1b.T,                      # (hid_vec, dh2)
        ws2[:, :dh2].T,              # (dh2, 1)
        ws2[:, dh2:].T,              # (hid_sca, 1)
    )


@functools.partial(jax.jit, static_argnames=("tile_m",))
def frontier_layer_vn(h_att, idx_ligans, params, *, tile_m=256):
    h_sca, h_vec = h_att
    (w1v, w2v, wsn1, wss1, wg, bg, wd, w1vb, wsn2, wss2) = params
    bf = jnp.bfloat16
    f32 = jnp.float32

    M = idx_ligans.shape[0]
    S = h_sca.shape[1]
    V = h_vec.shape[1]

    # Tile size: multiple of 16 (bf16 sublane packing).  Cap so the grid has >= 4 steps
    # when M is small (v7x 2-TC sharding + pipeline overlap).  At tile_m <= 512 the
    # per-tile VMEM footprint is well under every generation's scoped default, so no
    # vmem_limit_bytes override is needed.
    cap = max(16, _round_up(-(-M // 4), 16))
    tile_m = int(max(16, min(_round_up(tile_m, 16), cap)))
    M_pad = _round_up(M, tile_m)
    idx_pad = jnp.pad(idx_ligans, (0, M_pad - M))            # pad rows gather node 0; sliced off

    # Row gather + component-major lane packing + bf16 cast are XLA glue (fused by jit).
    sca = h_sca[idx_pad].astype(bf)                                               # (M_pad, S)
    vec = jnp.transpose(h_vec[idx_pad], (0, 2, 1)).reshape(M_pad, 3 * V).astype(bf)  # (M_pad, 3V)

    # Kernel-layout weights: fused / block-diagonal / gate-tiled (tiny, constant-folded).
    w12 = w1v @ w2v                                              # fuse lin_vector @ lin_vector2
    kweights = (
        _block_diag3(w1v).astype(bf),                            # (3V,   3*dh1)
        _block_diag3(w12).astype(bf),                            # (3V,   3*HV)
        wsn1.astype(bf),                                         # (dh1,  HS)
        wss1.astype(bf),                                         # (S,    HS)
        jnp.concatenate([wg, wg, wg], axis=1).astype(bf),        # (HS,   3*HV)
        jnp.concatenate([bg, bg, bg], axis=1).astype(f32),       # (1,    3*HV)
        _block_diag3(wd).astype(bf),                             # (3*HV, 3*HV)
        _block_diag3(w1vb).astype(bf),                           # (3*HV, 3*dh2)
        wsn2.astype(f32),                                        # (dh2,  1)
        wss2.astype(f32),                                        # (HS,   1)
    )

    grid = (M_pad // tile_m,)
    in_specs = [
        pl.BlockSpec((tile_m, S), lambda i: (i, 0)),             # scalar feats tile
        pl.BlockSpec((tile_m, 3 * V), lambda i: (i, 0)),         # lane-packed vector feats tile
    ] + [pl.BlockSpec(w.shape, lambda i: (0, 0)) for w in kweights]  # weights stay VMEM-resident

    out = pl.pallas_call(
        frontier_kernel,
        out_shape=jax.ShapeDtypeStruct((M_pad, 1), jnp.float32),
        grid=grid,
        in_specs=in_specs,
        out_specs=pl.BlockSpec((tile_m, 1), lambda i: (i, 0)),
        compiler_params=pltpu.CompilerParams(
            dimension_semantics=("parallel",)),                  # megacore sharding on v7x
    )(sca, vec, *kweights)
    return out[:M]


def frontier_ref(h_att, idx_ligans, params):
    """Pure-JAX f32 reference mirroring the PyTorch forward."""
    (w1v, w2v, wsn1, wss1, wg, bg, wd, w1vb, wsn2, wss2) = params
    sca = h_att[0][idx_ligans].astype(jnp.float32)           # (M, S)
    vec = h_att[1][idx_ligans].astype(jnp.float32)           # (M, V, 3)

    # Layer 1 GVLinear
    vi = jnp.einsum('mvk,vh->mhk', vec, w1v)                 # (M, dh1, 3)
    nrm = jnp.linalg.norm(vi, axis=-1)                       # (M, dh1)
    out_s = nrm @ wsn1 + sca @ wss1                          # (M, HS)
    ov = jnp.einsum('mhk,ho->mok', vi, w2v)                  # (M, HV, 3)
    gate = jax.nn.sigmoid(out_s @ wg + bg)[..., None]        # (M, HV, 1)
    ov = gate * ov
    # VNLeakyReLU
    d = jnp.einsum('mhk,ho->mok', ov, wd)
    dot = jnp.sum(ov * d, -1, keepdims=True)
    dnsq = jnp.sum(d * d, -1, keepdims=True)
    mask = (dot >= 0).astype(jnp.float32)
    ov = VN_SLOPE * ov + (1 - VN_SLOPE) * (
        mask * ov + (1 - mask) * (ov - (dot / (dnsq + EPS)) * d))
    sca1 = jnp.where(out_s >= 0, out_s, LRELU_SLOPE * out_s)
    # Layer 2 GVLinear (scalar output)
    vj = jnp.einsum('mhk,ho->mok', ov, w1vb)
    nrm2 = jnp.linalg.norm(vj, axis=-1)
    return nrm2 @ wsn2 + sca1 @ wss2                          # (M, 1)


if __name__ == "__main__":
    in_sca, in_vec = 16, 8
    hid_sca, hid_vec = 32, 16
    N, M = 64, 200                       # M > tile cap -> exercises grid + padding path

    key = jax.random.PRNGKey(0)
    k_sca, k_vec, k_idx, k_par = jax.random.split(key, 4)
    h_sca = jax.random.normal(k_sca, (N, in_sca), jnp.float32)
    h_vec = jax.random.normal(k_vec, (N, in_vec, 3), jnp.float32)
    idx_ligans = jax.random.randint(k_idx, (M,), 0, N, jnp.int32)
    params = init_params(k_par, in_sca, in_vec, hid_sca, hid_vec)

    pred = frontier_layer_vn((h_sca, h_vec), idx_ligans, params)
    pred = jax.block_until_ready(pred)

    ref = frontier_ref((h_sca, h_vec), idx_ligans, params)
    assert pred.shape == (M, 1)
    # Tolerance sized for the bf16 MXU path (f32 accumulation) + approx reciprocal.
    max_err = float(jnp.max(jnp.abs(pred - ref)))
    assert jnp.allclose(pred, ref, atol=5e-2, rtol=5e-2), ("max_abs_err", max_err)
    print("KERNEL_OK")
</pallas_src>

<mosaic_0001>
module attributes {stable_mosaic.version = 11 : i64} {
  func.func @frontier_kernel(%arg0: i32, %arg1: memref<64x16xbf16, #tpu.memory_space<vmem>>, %arg2: memref<64x24xbf16, #tpu.memory_space<vmem>>, %arg3: memref<24x48xbf16, #tpu.memory_space<vmem>>, %arg4: memref<24x48xbf16, #tpu.memory_space<vmem>>, %arg5: memref<16x32xbf16, #tpu.memory_space<vmem>>, %arg6: memref<16x32xbf16, #tpu.memory_space<vmem>>, %arg7: memref<32x48xbf16, #tpu.memory_space<vmem>>, %arg8: memref<1x48xf32, #tpu.memory_space<vmem>>, %arg9: memref<48x48xbf16, #tpu.memory_space<vmem>>, %arg10: memref<48x48xbf16, #tpu.memory_space<vmem>>, %arg11: memref<16x1xf32, #tpu.memory_space<vmem>>, %arg12: memref<32x1xf32, #tpu.memory_space<vmem>>, %arg13: memref<64x1xf32, #tpu.memory_space<vmem>>) attributes {dimension_semantics = [#tpu.dimension_semantics<parallel>], iteration_bounds = array<i64: 4>, scalar_prefetch = 0 : i64, scratch_operands = 0 : i64, tpu.core_type = #tpu.core_type<tc>, window_params = [{transform_indices = @transform_0, window_bounds = array<i64: 64, 16>}, {transform_indices = @transform_1, window_bounds = array<i64: 64, 24>}, {pipeline_mode = #tpu.pipeline_mode<synchronous>, transform_indices = @transform_2, window_bounds = array<i64: 24, 48>}, {pipeline_mode = #tpu.pipeline_mode<synchronous>, transform_indices = @transform_3, window_bounds = array<i64: 24, 48>}, {pipeline_mode = #tpu.pipeline_mode<synchronous>, transform_indices = @transform_4, window_bounds = array<i64: 16, 32>}, {pipeline_mode = #tpu.pipeline_mode<synchronous>, transform_indices = @transform_5, window_bounds = array<i64: 16, 32>}, {pipeline_mode = #tpu.pipeline_mode<synchronous>, transform_indices = @transform_6, window_bounds = array<i64: 32, 48>}, {pipeline_mode = #tpu.pipeline_mode<synchronous>, transform_indices = @transform_7, window_bounds = array<i64: 1, 48>}, {pipeline_mode = #tpu.pipeline_mode<synchronous>, transform_indices = @transform_8, window_bounds = array<i64: 48, 48>}, {pipeline_mode = #tpu.pipeline_mode<synchronous>, transform_indices = @transform_9, window_bounds = array<i64: 48, 48>}, {pipeline_mode = #tpu.pipeline_mode<synchronous>, transform_indices = @transform_10, window_bounds = array<i64: 16, 1>}, {pipeline_mode = #tpu.pipeline_mode<synchronous>, transform_indices = @transform_11, window_bounds = array<i64: 32, 1>}, {transform_indices = @transform_12, window_bounds = array<i64: 64, 1>}]} {
    %c0 = arith.constant 0 : index
    %c0_0 = arith.constant 0 : index
    %0 = vector.load %arg1[%c0, %c0_0] : memref<64x16xbf16, #tpu.memory_space<vmem>>, vector<64x16xbf16>
    %c0_1 = arith.constant 0 : index
    %c0_2 = arith.constant 0 : index
    %1 = vector.load %arg2[%c0_1, %c0_2] : memref<64x24xbf16, #tpu.memory_space<vmem>>, vector<64x24xbf16>
    %c0_3 = arith.constant 0 : index
    %c0_4 = arith.constant 0 : index
    %2 = vector.load %arg3[%c0_3, %c0_4] : memref<24x48xbf16, #tpu.memory_space<vmem>>, vector<24x48xbf16>
    %cst = arith.constant dense<0.000000e+00> : vector<64x48xf32>
    %3 = tpu.matmul %1, %2, %cst {dimension_numbers = #tpu.dot_dimension_numbers<[1], [0], [0], [1], [0, 0, 1, 1], [], []>} : vector<64x24xbf16>, vector<24x48xbf16>, vector<64x48xf32> -> vector<64x48xf32>
    %4 = vector.extract_strided_slice %3 {offsets = [0, 0], sizes = [64, 16], strides = [1, 1]} : vector<64x48xf32> to vector<64x16xf32>
    %5 = vector.extract_strided_slice %3 {offsets = [0, 16], sizes = [64, 16], strides = [1, 1]} : vector<64x48xf32> to vector<64x16xf32>
    %6 = vector.extract_strided_slice %3 {offsets = [0, 32], sizes = [64, 16], strides = [1, 1]} : vector<64x48xf32> to vector<64x16xf32>
    %7 = arith.mulf %4, %4 : vector<64x16xf32>
    %8 = arith.mulf %5, %5 : vector<64x16xf32>
    %9 = arith.addf %7, %8 : vector<64x16xf32>
    %10 = arith.mulf %6, %6 : vector<64x16xf32>
    %11 = arith.addf %9, %10 : vector<64x16xf32>
    %12 = math.sqrt %11 : vector<64x16xf32>
    %13 = arith.truncf %12 : vector<64x16xf32> to vector<64x16xbf16>
    %c0_5 = arith.constant 0 : index
    %c0_6 = arith.constant 0 : index
    %14 = vector.load %arg5[%c0_5, %c0_6] : memref<16x32xbf16, #tpu.memory_space<vmem>>, vector<16x32xbf16>
    %cst_7 = arith.constant dense<0.000000e+00> : vector<64x32xf32>
    %15 = tpu.matmul %13, %14, %cst_7 {dimension_numbers = #tpu.dot_dimension_numbers<[1], [0], [0], [1], [0, 0, 1, 1], [], []>} : vector<64x16xbf16>, vector<16x32xbf16>, vector<64x32xf32> -> vector<64x32xf32>
    %c0_8 = arith.constant 0 : index
    %c0_9 = arith.constant 0 : index
    %16 = vector.load %arg6[%c0_8, %c0_9] : memref<16x32xbf16, #tpu.memory_space<vmem>>, vector<16x32xbf16>
    %cst_10 = arith.constant dense<0.000000e+00> : vector<64x32xf32>
    %17 = tpu.matmul %0, %16, %cst_10 {dimension_numbers = #tpu.dot_dimension_numbers<[1], [0], [0], [1], [0, 0, 1, 1], [], []>} : vector<64x16xbf16>, vector<16x32xbf16>, vector<64x32xf32> -> vector<64x32xf32>
    %18 = arith.addf %15, %17 : vector<64x32xf32>
    %c0_11 = arith.constant 0 : index
    %c0_12 = arith.constant 0 : index
    %19 = vector.load %arg4[%c0_11, %c0_12] : memref<24x48xbf16, #tpu.memory_space<vmem>>, vector<24x48xbf16>
    %cst_13 = arith.constant dense<0.000000e+00> : vector<64x48xf32>
    %20 = tpu.matmul %1, %19, %cst_13 {dimension_numbers = #tpu.dot_dimension_numbers<[1], [0], [0], [1], [0, 0, 1, 1], [], []>} : vector<64x24xbf16>, vector<24x48xbf16>, vector<64x48xf32> -> vector<64x48xf32>
    %21 = arith.truncf %18 : vector<64x32xf32> to vector<64x32xbf16>
    %c0_14 = arith.constant 0 : index
    %c0_15 = arith.constant 0 : index
    %22 = vector.load %arg7[%c0_14, %c0_15] : memref<32x48xbf16, #tpu.memory_space<vmem>>, vector<32x48xbf16>
    %cst_16 = arith.constant dense<0.000000e+00> : vector<64x48xf32>
    %23 = tpu.matmul %21, %22, %cst_16 {dimension_numbers = #tpu.dot_dimension_numbers<[1], [0], [0], [1], [0, 0, 1, 1], [], []>} : vector<64x32xbf16>, vector<32x48xbf16>, vector<64x48xf32> -> vector<64x48xf32>
    %c0_17 = arith.constant 0 : index
    %c0_18 = arith.constant 0 : index
    %24 = vector.load %arg8[%c0_17, %c0_18] : memref<1x48xf32, #tpu.memory_space<vmem>>, vector<1x48xf32>
    %25 = vector.broadcast %24 : vector<1x48xf32> to vector<64x48xf32>
    %26 = arith.addf %23, %25 : vector<64x48xf32>
    %27 = arith.negf %26 : vector<64x48xf32>
    %28 = math.exp %27 : vector<64x48xf32>
    %cst_19 = arith.constant 1.000000e+00 : f32
    %29 = vector.broadcast %cst_19 : f32 to vector<64x48xf32>
    %30 = arith.addf %29, %28 : vector<64x48xf32>
    %31 = arith.divf %29, %30 : vector<64x48xf32>
    %32 = arith.mulf %20, %31 : vector<64x48xf32>
    %33 = arith.truncf %32 : vector<64x48xf32> to vector<64x48xbf16>
    %c0_20 = arith.constant 0 : index
    %c0_21 = arith.constant 0 : index
    %34 = vector.load %arg9[%c0_20, %c0_21] : memref<48x48xbf16, #tpu.memory_space<vmem>>, vector<48x48xbf16>
    %cst_22 = arith.constant dense<0.000000e+00> : vector<64x48xf32>
    %35 = tpu.matmul %33, %34, %cst_22 {dimension_numbers = #tpu.dot_dimension_numbers<[1], [0], [0], [1], [0, 0, 1, 1], [], []>} : vector<64x48xbf16>, vector<48x48xbf16>, vector<64x48xf32> -> vector<64x48xf32>
    %36 = vector.extract_strided_slice %32 {offsets = [0, 0], sizes = [64, 16], strides = [1, 1]} : vector<64x48xf32> to vector<64x16xf32>
    %37 = vector.extract_strided_slice %32 {offsets = [0, 16], sizes = [64, 16], strides = [1, 1]} : vector<64x48xf32> to vector<64x16xf32>
    %38 = vector.extract_strided_slice %32 {offsets = [0, 32], sizes = [64, 16], strides = [1, 1]} : vector<64x48xf32> to vector<64x16xf32>
    %39 = vector.extract_strided_slice %35 {offsets = [0, 0], sizes = [64, 16], strides = [1, 1]} : vector<64x48xf32> to vector<64x16xf32>
    %40 = vector.extract_strided_slice %35 {offsets = [0, 16], sizes = [64, 16], strides = [1, 1]} : vector<64x48xf32> to vector<64x16xf32>
    %41 = vector.extract_strided_slice %35 {offsets = [0, 32], sizes = [64, 16], strides = [1, 1]} : vector<64x48xf32> to vector<64x16xf32>
    %42 = arith.mulf %36, %39 : vector<64x16xf32>
    %43 = arith.mulf %37, %40 : vector<64x16xf32>
    %44 = arith.addf %42, %43 : vector<64x16xf32>
    %45 = arith.mulf %38, %41 : vector<64x16xf32>
    %46 = arith.addf %44, %45 : vector<64x16xf32>
    %47 = arith.mulf %39, %39 : vector<64x16xf32>
    %48 = arith.mulf %40, %40 : vector<64x16xf32>
    %49 = arith.addf %47, %48 : vector<64x16xf32>
    %50 = arith.mulf %41, %41 : vector<64x16xf32>
    %51 = arith.addf %49, %50 : vector<64x16xf32>
    %cst_23 = arith.constant 9.99999997E-7 : f32
    %52 = vector.broadcast %cst_23 : f32 to vector<64x16xf32>
    %53 = arith.addf %51, %52 : vector<64x16xf32>
    %54 = tpu.reciprocal %53 {approx = true} : vector<64x16xf32> -> vector<64x16xf32>
    %55 = arith.mulf %46, %54 : vector<64x16xf32>
    %cst_24 = arith.constant 0.000000e+00 : f32
    %56 = vector.broadcast %cst_24 : f32 to vector<64x16xf32>
    %57 = arith.cmpf oge, %46, %56 : vector<64x16xf32>
    %cst_25 = arith.constant 0.000000e+00 : f32
    %58 = vector.broadcast %cst_25 : f32 to vector<64x16xf32>
    %59 = arith.select %57, %58, %55 : vector<64x16xi1>, vector<64x16xf32>
    %cst_26 = arith.constant 8.000000e-01 : f32
    %60 = vector.broadcast %cst_26 : f32 to vector<64x16xf32>
    %61 = arith.mulf %60, %59 : vector<64x16xf32>
    %62 = tpu.concatenate %61, %61, %61 in 1 : vector<64x16xf32>, vector<64x16xf32>, vector<64x16xf32> -> vector<64x48xf32>
    %63 = arith.mulf %62, %35 : vector<64x48xf32>
    %64 = arith.subf %32, %63 : vector<64x48xf32>
    %cst_27 = arith.constant 0.000000e+00 : f32
    %65 = vector.broadcast %cst_27 : f32 to vector<64x32xf32>
    %66 = arith.cmpf oge, %18, %65 : vector<64x32xf32>
    %cst_28 = arith.constant 0.00999999977 : f32
    %67 = vector.broadcast %cst_28 : f32 to vector<64x32xf32>
    %68 = arith.mulf %67, %18 : vector<64x32xf32>
    %69 = arith.select %66, %18, %68 : vector<64x32xi1>, vector<64x32xf32>
    %70 = arith.truncf %64 : vector<64x48xf32> to vector<64x48xbf16>
    %c0_29 = arith.constant 0 : index
    %c0_30 = arith.constant 0 : index
    %71 = vector.load %arg10[%c0_29, %c0_30] : memref<48x48xbf16, #tpu.memory_space<vmem>>, vector<48x48xbf16>
    %cst_31 = arith.constant dense<0.000000e+00> : vector<64x48xf32>
    %72 = tpu.matmul %70, %71, %cst_31 {dimension_numbers = #tpu.dot_dimension_numbers<[1], [0], [0], [1], [0, 0, 1, 1], [], []>} : vector<64x48xbf16>, vector<48x48xbf16>, vector<64x48xf32> -> vector<64x48xf32>
    %73 = vector.extract_strided_slice %72 {offsets = [0, 0], sizes = [64, 16], strides = [1, 1]} : vector<64x48xf32> to vector<64x16xf32>
    %74 = vector.extract_strided_slice %72 {offsets = [0, 16], sizes = [64, 16], strides = [1, 1]} : vector<64x48xf32> to vector<64x16xf32>
    %75 = vector.extract_strided_slice %72 {offsets = [0, 32], sizes = [64, 16], strides = [1, 1]} : vector<64x48xf32> to vector<64x16xf32>
    %76 = arith.mulf %73, %73 : vector<64x16xf32>
    %77 = arith.mulf %74, %74 : vector<64x16xf32>
    %78 = arith.addf %76, %77 : vector<64x16xf32>
    %79 = arith.mulf %75, %75 : vector<64x16xf32>
    %80 = arith.addf %78, %79 : vector<64x16xf32>
    %81 = math.sqrt %80 : vector<64x16xf32>
    %c0_32 = arith.constant 0 : index
    %c0_33 = arith.constant 0 : index
    %82 = vector.load %arg11[%c0_32, %c0_33] : memref<16x1xf32, #tpu.memory_space<vmem>>, vector<16x1xf32>
    %cst_34 = arith.constant dense<0.000000e+00> : vector<64x1xf32>
    %83 = tpu.matmul %81, %82, %cst_34 {dimension_numbers = #tpu.dot_dimension_numbers<[1], [0], [0], [1], [0, 0, 1, 1], [], []>} : vector<64x16xf32>, vector<16x1xf32>, vector<64x1xf32> -> vector<64x1xf32>
    %c0_35 = arith.constant 0 : index
    %c0_36 = arith.constant 0 : index
    %84 = vector.load %arg12[%c0_35, %c0_36] : memref<32x1xf32, #tpu.memory_space<vmem>>, vector<32x1xf32>
    %cst_37 = arith.constant dense<0.000000e+00> : vector<64x1xf32>
    %85 = tpu.matmul %69, %84, %cst_37 {dimension_numbers = #tpu.dot_dimension_numbers<[1], [0], [0], [1], [0, 0, 1, 1], [], []>} : vector<64x32xf32>, vector<32x1xf32>, vector<64x1xf32> -> vector<64x1xf32>
    %86 = arith.addf %83, %85 : vector<64x1xf32>
    %c0_38 = arith.constant 0 : index
    %c0_39 = arith.constant 0 : index
    %87 = vector.load %arg13[%c0_38, %c0_39] : memref<64x1xf32, #tpu.memory_space<vmem>>, vector<64x1xf32>
    tpu.vector_store %arg13[%c0_38, %c0_39], %86 {strides = array<i32>} : memref<64x1xf32, #tpu.memory_space<vmem>>, vector<64x1xf32>,
    return
  }
  func.func @transform_0(%arg0: i32) -> (i32, i32) {
    %c0_i32 = arith.constant 0 : i32
    %c0_i32_0 = arith.constant 0 : i32
    return %arg0, %c0_i32 : i32, i32
  }
  func.func @transform_1(%arg0: i32) -> (i32, i32) {
    %c0_i32 = arith.constant 0 : i32
    %c0_i32_0 = arith.constant 0 : i32
    return %arg0, %c0_i32 : i32, i32
  }
  func.func @transform_2(%arg0: i32) -> (i32, i32) {
    %c0_i32 = arith.constant 0 : i32
    %c0_i32_0 = arith.constant 0 : i32
    %c0_i32_1 = arith.constant 0 : i32
    return %c0_i32, %c0_i32_0 : i32, i32
  }
  func.func @transform_3(%arg0: i32) -> (i32, i32) {
    %c0_i32 = arith.constant 0 : i32
    %c0_i32_0 = arith.constant 0 : i32
    %c0_i32_1 = arith.constant 0 : i32
    return %c0_i32, %c0_i32_0 : i32, i32
  }
  func.func @transform_4(%arg0: i32) -> (i32, i32) {
    %c0_i32 = arith.constant 0 : i32
    %c0_i32_0 = arith.constant 0 : i32
    %c0_i32_1 = arith.constant 0 : i32
    return %c0_i32, %c0_i32_0 : i32, i32
  }
  func.func @transform_5(%arg0: i32) -> (i32, i32) {
    %c0_i32 = arith.constant 0 : i32
    %c0_i32_0 = arith.constant 0 : i32
    %c0_i32_1 = arith.constant 0 : i32
    return %c0_i32, %c0_i32_0 : i32, i32
  }
  func.func @transform_6(%arg0: i32) -> (i32, i32) {
    %c0_i32 = arith.constant 0 : i32
    %c0_i32_0 = arith.constant 0 : i32
    %c0_i32_1 = arith.constant 0 : i32
    return %c0_i32, %c0_i32_0 : i32, i32
  }
  func.func @transform_7(%arg0: i32) -> (i32, i32) {
    %c0_i32 = arith.constant 0 : i32
    %c0_i32_0 = arith.constant 0 : i32
    %c0_i32_1 = arith.constant 0 : i32
    return %c0_i32, %c0_i32_0 : i32, i32
  }
  func.func @transform_8(%arg0: i32) -> (i32, i32) {
    %c0_i32 = arith.constant 0 : i32
    %c0_i32_0 = arith.constant 0 : i32
    %c0_i32_1 = arith.constant 0 : i32
    return %c0_i32, %c0_i32_0 : i32, i32
  }
  func.func @transform_9(%arg0: i32) -> (i32, i32) {
    %c0_i32 = arith.constant 0 : i32
    %c0_i32_0 = arith.constant 0 : i32
    %c0_i32_1 = arith.constant 0 : i32
    return %c0_i32, %c0_i32_0 : i32, i32
  }
  func.func @transform_10(%arg0: i32) -> (i32, i32) {
    %c0_i32 = arith.constant 0 : i32
    %c0_i32_0 = arith.constant 0 : i32
    %c0_i32_1 = arith.constant 0 : i32
    return %c0_i32, %c0_i32_0 : i32, i32
  }
  func.func @transform_11(%arg0: i32) -> (i32, i32) {
    %c0_i32 = arith.constant 0 : i32
    %c0_i32_0 = arith.constant 0 : i32
    %c0_i32_1 = arith.constant 0 : i32
    return %c0_i32, %c0_i32_0 : i32, i32
  }
  func.func @transform_12(%arg0: i32) -> (i32, i32) {
    %c0_i32 = arith.constant 0 : i32
    %c0_i32_0 = arith.constant 0 : i32
    return %arg0, %c0_i32 : i32, i32
  }
}

</mosaic_0001>

<llo_original>
// kernel: frontier_layer_vn.1
$region0: #{frontier_layer_vn.1}
  #allocation0 [shape = 'u32[]', space=smem, size = 0x4, offset = 0x4, fixed_abs, tag = 'smem constant byte address 0x4 - core index']
  #allocation1 [shape = 'u32[72,128]{1,0:T(1,128)}', space=vmem, size = 0x9000, scoped, tag = 'internal scratch']
  %s0 = inlined_call_operand.vmem [shape: bf16[256,16], index: 0, kind: input, shape index: {}]
  %s1 = inlined_call_operand.vmem [shape: bf16[256,24], index: 1, kind: input, shape index: {}]
  %s2 = inlined_call_operand.vmem [shape: bf16[24,48], index: 2, kind: input, shape index: {}]
  %s3 = inlined_call_operand.vmem [shape: bf16[24,48], index: 3, kind: input, shape index: {}]
  %s4 = inlined_call_operand.vmem [shape: bf16[16,32], index: 4, kind: input, shape index: {}]
  %s5 = inlined_call_operand.vmem [shape: bf16[16,32], index: 5, kind: input, shape index: {}]
  %s6 = inlined_call_operand.vmem [shape: bf16[32,48], index: 6, kind: input, shape index: {}]
  %s7 = inlined_call_operand.vmem [shape: f32[1,48], index: 7, kind: input, shape index: {}]
  %s8 = inlined_call_operand.vmem [shape: bf16[48,48], index: 8, kind: input, shape index: {}]
  %s9 = inlined_call_operand.vmem [shape: bf16[48,48], index: 9, kind: input, shape index: {}]
  %s10 = inlined_call_operand.vmem [shape: f32[16,1], index: 10, kind: input, shape index: {}]
  %s11 = inlined_call_operand.vmem [shape: f32[32,1], index: 11, kind: input, shape index: {}]
  %s12 = inlined_call_operand.vmem [shape: f32[256,1], index: 12, kind: output, shape index: {}]
  %s13 = sld [smem:[#allocation0]]
  $region81: #{frontier_layer_vn.1} parent=0
    _
  %s15 = ssub.s32 1, %s13
  %s16 = scalar_select 0, %s15, %s13
  loop: start=0, step=1, limit=6
  $region2: #{frontier_layer_vn.1} parent=0 // loop_pre_header
    _
  $region3: #{frontier_layer_vn.1} parent=0 // loop_header
    %s18 = sphi 0, %s22
    %p19 = scmp.ge.s32.totalorder %s18, 6
    %s28 = sphi 0, %s30
    %s31 = sphi 0, %s28
    %s32 = sphi 0, %s31
    %s48 = sphi 0, %s32
    %s54 = sphi 0, %s56
    %s57 = sphi 0, %s54
    %s58 = sphi 0, %s57
    %s74 = sphi 0, %s58
    %s78 = sphi 0, %s78
    %s80 = sphi 0, %s78
    %s81 = sphi 0, %s80
    %s95 = sphi 0, %s81
    %s99 = sphi 0, %s99
    %s101 = sphi 0, %s99
    %s102 = sphi 0, %s101
    %s116 = sphi 0, %s102
    %s120 = sphi 0, %s120
    %s122 = sphi 0, %s120
    %s123 = sphi 0, %s122
    %s137 = sphi 0, %s123
    %s141 = sphi 0, %s141
    %s143 = sphi 0, %s141
    %s144 = sphi 0, %s143
    %s158 = sphi 0, %s144
    %s162 = sphi 0, %s162
    %s164 = sphi 0, %s162
    %s165 = sphi 0, %s164
    %s179 = sphi 0, %s165
    %s183 = sphi 0, %s183
    %s185 = sphi 0, %s183
    %s186 = sphi 0, %s185
    %s200 = sphi 0, %s186
    %s204 = sphi 0, %s204
    %s206 = sphi 0, %s204
    %s207 = sphi 0, %s206
    %s221 = sphi 0, %s207
    %s225 = sphi 0, %s225
    %s227 = sphi 0, %s225
    %s228 = sphi 0, %s227
    %s242 = sphi 0, %s228
    %s246 = sphi 0, %s246
    %s248 = sphi 0, %s246
    %s249 = sphi 0, %s248
    %s263 = sphi 0, %s249
    %s267 = sphi 0, %s267
    %s269 = sphi 0, %s267
    %s270 = sphi 0, %s269
    %s284 = sphi 0, %s270
    %s290 = sphi 0, %s292
    %s293 = sphi 0, %s290
    %s294 = sphi 0, %s293
    %s310 = sphi 0, %s294
  $region4: #{frontier_layer_vn.1} parent=0 // loop_header_branch
    %21 = sbr.rel (%p19) target = $region8
  $region5: #{frontier_layer_vn.1} parent=0 // loop_body
    %s23 = ssub.s32 %s18, 1
    %s24 = ssub.s32 %s18, 2
    %s25 = sadd.s32 %s18, 1
    %s26 = ssub.s32 %s18, %s25
    %p27 = scmp.eq.s32.totalorder %s26, 0
    %s29 = sadd.s32 %s28, 1
    %s30 = scalar_select %p27, %s28, %s29
    %p33 = pneg %p27
    %p34 = scmp.eq.s32.totalorder %s18, 3
    %p35 = por %p33, %p34
    %p36 = scmp.ne.s32.totalorder %s28, %s31
    %p37 = scmp.eq.s32.totalorder %s18, 0
    %p38 = por %p36, %p37
    %p39 = scmp.ne.s32.totalorder %s28, %s31
    %p40 = scmp.eq.s32.totalorder %s23, 3
    %p41 = por %p39, %p40
    %p42 = scmp.ne.s32.totalorder %s31, %s32
    %p43 = scmp.eq.s32.totalorder %s23, 0
    %p44 = por %p42, %p43
    %p45 = scmp.ne.s32.totalorder %s31, %s32
    %p46 = scmp.eq.s32.totalorder %s24, 3
    %p47 = por %p45, %p46
    %p49 = scmp.ne.s32.totalorder %s32, %s48
    %p50 = scmp.eq.s32.totalorder %s24, 0
    %p51 = por %p49, %p50
    %s52 = ssub.s32 %s18, %s25
    %p53 = scmp.eq.s32.totalorder %s52, 0
    %s55 = sadd.s32 %s54, 1
    %s56 = scalar_select %p53, %s54, %s55
    %p59 = pneg %p53
    %p60 = scmp.eq.s32.totalorder %s18, 3
    %p61 = por %p59, %p60
    %p62 = scmp.ne.s32.totalorder %s54, %s57
    %p63 = scmp.eq.s32.totalorder %s18, 0
    %p64 = por %p62, %p63
    %p65 = scmp.ne.s32.totalorder %s54, %s57
    %p66 = scmp.eq.s32.totalorder %s23, 3
    %p67 = por %p65, %p66
    %p68 = scmp.ne.s32.totalorder %s57, %s58
    %p69 = scmp.eq.s32.totalorder %s23, 0
    %p70 = por %p68, %p69
    %p71 = scmp.ne.s32.totalorder %s57, %s58
    %p72 = scmp.eq.s32.totalorder %s24, 3
    %p73 = por %p71, %p72
    %p75 = scmp.ne.s32.totalorder %s58, %s74
    %p76 = scmp.eq.s32.totalorder %s24, 0
    %p77 = por %p75, %p76
    %s79 = sadd.s32 %s78, 1
    %p82 = scmp.eq.s32.totalorder %s18, 3
    %p83 = scmp.ne.s32.totalorder %s78, %s80
    %p84 = scmp.eq.s32.totalorder %s18, 0
    %p85 = por %p83, %p84
    %p86 = scmp.ne.s32.totalorder %s78, %s80
    %p87 = scmp.eq.s32.totalorder %s23, 3
    %p88 = por %p86, %p87
    %p89 = scmp.ne.s32.totalorder %s80, %s81
    %p90 = scmp.eq.s32.totalorder %s23, 0
    %p91 = por %p89, %p90
    %p92 = scmp.ne.s32.totalorder %s80, %s81
    %p93 = scmp.eq.s32.totalorder %s24, 3
    %p94 = por %p92, %p93
    %p96 = scmp.ne.s32.totalorder %s81, %s95
    %p97 = scmp.eq.s32.totalorder %s24, 0
    %p98 = por %p96, %p97
    %s100 = sadd.s32 %s99, 1
    %p103 = scmp.eq.s32.totalorder %s18, 3
    %p104 = scmp.ne.s32.totalorder %s99, %s101
    %p105 = scmp.eq.s32.totalorder %s18, 0
    %p106 = por %p104, %p105
    %p107 = scmp.ne.s32.totalorder %s99, %s101
    %p108 = scmp.eq.s32.totalorder %s23, 3
    %p109 = por %p107, %p108
    %p110 = scmp.ne.s32.totalorder %s101, %s102
    %p111 = scmp.eq.s32.totalorder %s23, 0
    %p112 = por %p110, %p111
    %p113 = scmp.ne.s32.totalorder %s101, %s102
    %p114 = scmp.eq.s32.totalorder %s24, 3
    %p115 = por %p113, %p114
    %p117 = scmp.ne.s32.totalorder %s102, %s116
    %p118 = scmp.eq.s32.totalorder %s24, 0
    %p119 = por %p117, %p118
    %s121 = sadd.s32 %s120, 1
    %p124 = scmp.eq.s32.totalorder %s18, 3
    %p125 = scmp.ne.s32.totalorder %s120, %s122
    %p126 = scmp.eq.s32.totalorder %s18, 0
    %p127 = por %p125, %p126
    %p128 = scmp.ne.s32.totalorder %s120, %s122
    %p129 = scmp.eq.s32.totalorder %s23, 3
    %p130 = por %p128, %p129
    %p131 = scmp.ne.s32.totalorder %s122, %s123
    %p132 = scmp.eq.s32.totalorder %s23, 0
    %p133 = por %p131, %p132
    %p134 = scmp.ne.s32.totalorder %s122, %s123
    %p135 = scmp.eq.s32.totalorder %s24, 3
    %p136 = por %p134, %p135
    %p138 = scmp.ne.s32.totalorder %s123, %s137
    %p139 = scmp.eq.s32.totalorder %s24, 0
    %p140 = por %p138, %p139
    %s142 = sadd.s32 %s141, 1
    %p145 = scmp.eq.s32.totalorder %s18, 3
    %p146 = scmp.ne.s32.totalorder %s141, %s143
    %p147 = scmp.eq.s32.totalorder %s18, 0
    %p148 = por %p146, %p147
    %p149 = scmp.ne.s32.totalorder %s141, %s143
    %p150 = scmp.eq.s32.totalorder %s23, 3
    %p151 = por %p149, %p150
    %p152 = scmp.ne.s32.totalorder %s143, %s144
    %p153 = scmp.eq.s32.totalorder %s23, 0
    %p154 = por %p152, %p153
    %p155 = scmp.ne.s32.totalorder %s143, %s144
    %p156 = scmp.eq.s32.totalorder %s24, 3
    %p157 = por %p155, %p156
    %p159 = scmp.ne.s32.totalorder %s144, %s158
    %p160 = scmp.eq.s32.totalorder %s24, 0
    %p161 = por %p159, %p160
    %s163 = sadd.s32 %s162, 1
    %p166 = scmp.eq.s32.totalorder %s18, 3
    %p167 = scmp.ne.s32.totalorder %s162, %s164
    %p168 = scmp.eq.s32.totalorder %s18, 0
    %p169 = por %p167, %p168
    %p170 = scmp.ne.s32.totalorder %s162, %s164
    %p171 = scmp.eq.s32.totalorder %s23, 3
    %p172 = por %p170, %p171
    %p173 = scmp.ne.s32.totalorder %s164, %s165
    %p174 = scmp.eq.s32.totalorder %s23, 0
    %p175 = por %p173, %p174
    %p176 = scmp.ne.s32.totalorder %s164, %s165
    %p177 = scmp.eq.s32.totalorder %s24, 3
    %p178 = por %p176, %p177
    %p180 = scmp.ne.s32.totalorder %s165, %s179
    %p181 = scmp.eq.s32.totalorder %s24, 0
    %p182 = por %p180, %p181
    %s184 = sadd.s32 %s183, 1
    %p187 = scmp.eq.s32.totalorder %s18, 3
    %p188 = scmp.ne.s32.totalorder %s183, %s185
    %p189 = scmp.eq.s32.totalorder %s18, 0
    %p190 = por %p188, %p189
    %p191 = scmp.ne.s32.totalorder %s183, %s185
    %p192 = scmp.eq.s32.totalorder %s23, 3
    %p193 = por %p191, %p192
    %p194 = scmp.ne.s32.totalorder %s185, %s186
    %p195 = scmp.eq.s32.totalorder %s23, 0
    %p196 = por %p194, %p195
    %p197 = scmp.ne.s32.totalorder %s185, %s186
    %p198 = scmp.eq.s32.totalorder %s24, 3
    %p199 = por %p197, %p198
    %p201 = scmp.ne.s32.totalorder %s186, %s200
    %p202 = scmp.eq.s32.totalorder %s24, 0
    %p203 = por %p201, %p202
    %s205 = sadd.s32 %s204, 1
    %p208 = scmp.eq.s32.totalorder %s18, 3
    %p209 = scmp.ne.s32.totalorder %s204, %s206
    %p210 = scmp.eq.s32.totalorder %s18, 0
    %p211 = por %p209, %p210
    %p212 = scmp.ne.s32.totalorder %s204, %s206
    %p213 = scmp.eq.s32.totalorder %s23, 3
    %p214 = por %p212, %p213
    %p215 = scmp.ne.s32.totalorder %s206, %s207
    %p216 = scmp.eq.s32.totalorder %s23, 0
    %p217 = por %p215, %p216
    %p218 = scmp.ne.s32.totalorder %s206, %s207
    %p219 = scmp.eq.s32.totalorder %s24, 3
    %p220 = por %p218, %p219
    %p222 = scmp.ne.s32.totalorder %s207, %s221
    %p223 = scmp.eq.s32.totalorder %s24, 0
    %p224 = por %p222, %p223
    %s226 = sadd.s32 %s225, 1
    %p229 = scmp.eq.s32.totalorder %s18, 3
    %p230 = scmp.ne.s32.totalorder %s225, %s227
    %p231 = scmp.eq.s32.totalorder %s18, 0
    %p232 = por %p230, %p231
    %p233 = scmp.ne.s32.totalorder %s225, %s227
    %p234 = scmp.eq.s32.totalorder %s23, 3
    %p235 = por %p233, %p234
    %p236 = scmp.ne.s32.totalorder %s227, %s228
    %p237 = scmp.eq.s32.totalorder %s23, 0
    %p238 = por %p236, %p237
    %p239 = scmp.ne.s32.totalorder %s227, %s228
    %p240 = scmp.eq.s32.totalorder %s24, 3
    %p241 = por %p239, %p240
    %p243 = scmp.ne.s32.totalorder %s228, %s242
    %p244 = scmp.eq.s32.totalorder %s24, 0
    %p245 = por %p243, %p244
    %s247 = sadd.s32 %s246, 1
    %p250 = scmp.eq.s32.totalorder %s18, 3
    %p251 = scmp.ne.s32.totalorder %s246, %s248
    %p252 = scmp.eq.s32.totalorder %s18, 0
    %p253 = por %p251, %p252
    %p254 = scmp.ne.s32.totalorder %s246, %s248
    %p255 = scmp.eq.s32.totalorder %s23, 3
    %p256 = por %p254, %p255
    %p257 = scmp.ne.s32.totalorder %s248, %s249
    %p258 = scmp.eq.s32.totalorder %s23, 0
    %p259 = por %p257, %p258
    %p260 = scmp.ne.s32.totalorder %s248, %s249
    %p261 = scmp.eq.s32.totalorder %s24, 3
    %p262 = por %p260, %p261
    %p264 = scmp.ne.s32.totalorder %s249, %s263
    %p265 = scmp.eq.s32.totalorder %s24, 0
    %p266 = por %p264, %p265
    %s268 = sadd.s32 %s267, 1
    %p271 = scmp.eq.s32.totalorder %s18, 3
    %p272 = scmp.ne.s32.totalorder %s267, %s269
    %p273 = scmp.eq.s32.totalorder %s18, 0
    %p274 = por %p272, %p273
    %p275 = scmp.ne.s32.totalorder %s267, %s269
    %p276 = scmp.eq.s32.totalorder %s23, 3
    %p277 = por %p275, %p276
    %p278 = scmp.ne.s32.totalorder %s269, %s270
    %p279 = scmp.eq.s32.totalorder %s23, 0
    %p280 = por %p278, %p279
    %p281 = scmp.ne.s32.totalorder %s269, %s270
    %p282 = scmp.eq.s32.totalorder %s24, 3
    %p283 = por %p281, %p282
    %p285 = scmp.ne.s32.totalorder %s270, %s284
    %p286 = scmp.eq.s32.totalorder %s24, 0
    %p287 = por %p285, %p286
    %s288 = ssub.s32 %s18, %s25
    %p289 = scmp.eq.s32.totalorder %s288, 0
    %s291 = sadd.s32 %s290, 1
    %s292 = scalar_select %p289, %s290, %s291
    %p295 = pneg %p289
    %p296 = scmp.eq.s32.totalorder %s18, 3
    %p297 = por %p295, %p296
    %p298 = scmp.ne.s32.totalorder %s290, %s293
    %p299 = scmp.eq.s32.totalorder %s18, 0
    %p300 = por %p298, %p299
    %p301 = scmp.ne.s32.totalorder %s290, %s293
    %p302 = scmp.eq.s32.totalorder %s23, 3
    %p303 = por %p301, %p302
    %p304 = scmp.ne.s32.totalorder %s293, %s294
    %p305 = scmp.eq.s32.totalorder %s23, 0
    %p306 = por %p304, %p305
    %p307 = scmp.ne.s32.totalorder %s293, %s294
    %p308 = scmp.eq.s32.totalorder %s24, 3
    %p309 = por %p307, %p308
    %p311 = scmp.ne.s32.totalorder %s294, %s310
    %p312 = scmp.eq.s32.totalorder %s24, 0
    %p313 = por %p311, %p312
    %p314 = scmp.le.s32.totalorder 1, %s18
    %p315 = scmp.lt.s32.totalorder %s18, 5
    %p316 = pnand %p314, %p315
    %p317 = pneg %p316
    // Predicated region
    $region9: #{frontier_layer_vn.1} parent=5 // pred_check
      _
    $region10: #{frontier_layer_vn.1} parent=5 // pred_check_branch
      %319 = sbr.rel (%p316) target = $region12
    $region11: #{frontier_layer_vn.1} parent=5 // pred_region
      %s320 = ssub.s32 %s18, 1
      // Predicated region
      $region13: #{frontier_layer_vn.1} parent=11 // pred_check
        %p321 = pneg %p91
      $region14: #{frontier_layer_vn.1} parent=11 // pred_check_branch
        %323 = sbr.rel (%p321) target = $region16
      $region15: #{frontier_layer_vn.1} parent=11 // pred_region
        _
      $region16: #{frontier_layer_vn.1} parent=11 // pred_fallthru
        _
      // Predicated region
      $region17: #{frontier_layer_vn.1} parent=11 // pred_check
        %p324 = pneg %p112
      $region18: #{frontier_layer_vn.1} parent=11 // pred_check_branch
        %326 = sbr.rel (%p324) target = $region20
      $region19: #{frontier_layer_vn.1} parent=11 // pred_region
        _
      $region20: #{frontier_layer_vn.1} parent=11 // pred_fallthru
        _
      // Predicated region
      $region21: #{frontier_layer_vn.1} parent=11 // pred_check
        %p327 = pneg %p133
      $region22: #{frontier_layer_vn.1} parent=11 // pred_check_branch
        %329 = sbr.rel (%p327) target = $region24
      $region23: #{frontier_layer_vn.1} parent=11 // pred_region
        _
      $region24: #{frontier_layer_vn.1} parent=11 // pred_fallthru
        _
      // Predicated region
      $region25: #{frontier_layer_vn.1} parent=11 // pred_check
        %p330 = pneg %p154
      $region26: #{frontier_layer_vn.1} parent=11 // pred_check_branch
        %332 = sbr.rel (%p330) target = $region28
      $region27: #{frontier_layer_vn.1} parent=11 // pred_region
        _
      $region28: #{frontier_layer_vn.1} parent=11 // pred_fallthru
        _
      // Predicated region
      $region29: #{frontier_layer_vn.1} parent=11 // pred_check
        %p333 = pneg %p175
      $region30: #{frontier_layer_vn.1} parent=11 // pred_check_branch
        %335 = sbr.rel (%p333) target = $region32
      $region31: #{frontier_layer_vn.1} parent=11 // pred_region
        _
      $region32: #{frontier_layer_vn.1} parent=11 // pred_fallthru
        _
      // Predicated region
      $region33: #{frontier_layer_vn.1} parent=11 // pred_check
        %p336 = pneg %p196
      $region34: #{frontier_layer_vn.1} parent=11 // pred_check_branch
        %338 = sbr.rel (%p336) target = $region36
      $region35: #{frontier_layer_vn.1} parent=11 // pred_region
        _
      $region36: #{frontier_layer_vn.1} parent=11 // pred_fallthru
        _
      // Predicated region
      $region37: #{frontier_layer_vn.1} parent=11 // pred_check
        %p339 = pneg %p217
      $region38: #{frontier_layer_vn.1} parent=11 // pred_check_branch
        %341 = sbr.rel (%p339) target = $region40
      $region39: #{frontier_layer_vn.1} parent=11 // pred_region
        _
      $region40: #{frontier_layer_vn.1} parent=11 // pred_fallthru
        _
      // Predicated region
      $region41: #{frontier_layer_vn.1} parent=11 // pred_check
        %p342 = pneg %p238
      $region42: #{frontier_layer_vn.1} parent=11 // pred_check_branch
        %344 = sbr.rel (%p342) target = $region44
      $region43: #{frontier_layer_vn.1} parent=11 // pred_region
        _
      $region44: #{frontier_layer_vn.1} parent=11 // pred_fallthru
        _
      // Predicated region
      $region45: #{frontier_layer_vn.1} parent=11 // pred_check
        %p345 = pneg %p259
      $region46: #{frontier_layer_vn.1} parent=11 // pred_check_branch
        %347 = sbr.rel (%p345) target = $region48
      $region47: #{frontier_layer_vn.1} parent=11 // pred_region
        _
      $region48: #{frontier_layer_vn.1} parent=11 // pred_fallthru
        _
      // Predicated region
      $region49: #{frontier_layer_vn.1} parent=11 // pred_check
        %p348 = pneg %p280
      $region50: #{frontier_layer_vn.1} parent=11 // pred_check_branch
        %350 = sbr.rel (%p348) target = $region52
      $region51: #{frontier_layer_vn.1} parent=11 // pred_region
        _
      $region52: #{frontier_layer_vn.1} parent=11 // pred_fallthru
        _
    $region12: #{frontier_layer_vn.1} parent=5 // pred_fallthru
      _
    %p351 = scmp.lt.s32.totalorder %s18, 4
    // Predicated region
    $region53: #{frontier_layer_vn.1} parent=5 // pred_check
      %p352 = pneg %p351
    $region54: #{frontier_layer_vn.1} parent=5 // pred_check_branch
      %354 = sbr.rel (%p352) target = $region56
    $region55: #{frontier_layer_vn.1} parent=5 // pred_region
      // Predicated region
      $region57: #{frontier_layer_vn.1} parent=55 // pred_check
        %p355 = pneg %p38
      $region58: #{frontier_layer_vn.1} parent=55 // pred_check_branch
        %357 = sbr.rel (%p355) target = $region60
      $region59: #{frontier_layer_vn.1} parent=55 // pred_region
        %s358 = smul.u32 8, %s18
        %p359 = scmp.lt.s32.totalorder %s358, 31
        %s360 = scalar_select %p359, %s358, 31
        %s361 = smul.addr %s360, 4
        %s362 = scalar_lea.vmem %s0, %s361
        %s363 = smul.u32 8, %s18
      $region60: #{frontier_layer_vn.1} parent=55 // pred_fallthru
        _
      // Predicated region
      $region61: #{frontier_layer_vn.1} parent=55 // pred_check
        %p364 = pneg %p64
      $region62: #{frontier_layer_vn.1} parent=55 // pred_check_branch
        %366 = sbr.rel (%p364) target = $region64
      $region63: #{frontier_layer_vn.1} parent=55 // pred_region
        %s367 = smul.u32 8, %s18
        %p368 = scmp.lt.s32.totalorder %s367, 31
        %s369 = scalar_select %p368, %s367, 31
        %s370 = smul.addr %s369, 4
        %s371 = scalar_lea.vmem %s1, %s370
        %s372 = smul.u32 8, %s18
      $region64: #{frontier_layer_vn.1} parent=55 // pred_fallthru
        _
    $region56: #{frontier_layer_vn.1} parent=5 // pred_fallthru
      _
    %p373 = scmp.le.s32.totalorder 1, %s18
    %p374 = scmp.lt.s32.totalorder %s18, 5
    %p375 = pnand %p373, %p374
    %p376 = pneg %p375
    // Predicated region
    $region65: #{frontier_layer_vn.1} parent=5 // pred_check
      _
    $region66: #{frontier_layer_vn.1} parent=5 // pred_check_branch
      %378 = sbr.rel (%p375) target = $region68
    $region67: #{frontier_layer_vn.1} parent=5 // pred_region
      %s379 = ssub.s32 %s18, 1
      %s380 = smul.u32 8, %s23
      %p381 = scmp.lt.s32.totalorder %s380, 31
      %s382 = scalar_select %p381, %s380, 31
      %s383 = smul.addr %s382, 4
      %s384 = scalar_lea.vmem %s0, %s383
      %p385 = pneg %p44
      %p386 = pneg %p41
      %s387 = smul.u32 8, %s23
      %p388 = scmp.lt.s32.totalorder %s387, 31
      %s389 = scalar_select %p388, %s387, 31
      %s390 = smul.addr %s389, 4
      %s391 = scalar_lea.vmem %s1, %s390
      %p392 = pneg %p70
      %p393 = pneg %p67
      %p394 = pneg %p91
      %p395 = pneg %p88
      %p396 = pneg %p112
      %p397 = pneg %p109
      %p398 = pneg %p133
      %p399 = pneg %p130
      %p400 = pneg %p154
      %p401 = pneg %p151
      %p402 = pneg %p175
      %p403 = pneg %p172
      %p404 = pneg %p196
      %p405 = pneg %p193
      %p406 = pneg %p217
      %p407 = pneg %p214
      %p408 = pneg %p238
      %p409 = pneg %p235
      %p410 = pneg %p259
      %p411 = pneg %p256
      %p412 = pneg %p280
      %p413 = pneg %p277
      %p414 = pneg %p306
      %p415 = pneg %p303
      %s416 = smul.u32 8, %s23
      %p417 = scmp.lt.s32.totalorder %s416, 31
      %s418 = scalar_select %p417, %s416, 31
      %s419 = smul.addr %s418, 8
      %s420 = scalar_lea.vmem %s12, %s419
      %s421 = smul.u32 8, %s23
      %p422 = scmp.lt.s32.totalorder %s421, 31
      %s423 = scalar_select %p422, %s421, 31
      %s424 = smul.addr %s423, 4
      %s425 = scalar_lea.vmem %s0, %s424
      %s426 = smul.u32 8, %s23
      %s427 = smul.u32 8, %s23
      %p428 = scmp.lt.s32.totalorder %s427, 31
      %s429 = scalar_select %p428, %s427, 31
      %s430 = smul.addr %s429, 4
      %s431 = scalar_lea.vmem %s1, %s430
      %s432 = smul.u32 8, %s23
      %s433 = smul.u32 8, %s23
      %p434 = scmp.lt.s32.totalorder %s433, 31
      %s435 = scalar_select %p434, %s433, 31
      %s436 = smul.addr %s435, 8
      %s437 = scalar_lea.vmem %s12, %s436
      %s438 = smul.u32 8, %s23
      %v440 = vld [vmem:[%s425] sm:$0xf]
      %v441 = vld [vmem:[%s425 + $0x4] sm:$0xf]
      %v442 = vld [vmem:[%s425 + $0x8] sm:$0xf]
      %v443 = vld [vmem:[%s425 + $0xc] sm:$0xf]
      %v444 = vld [vmem:[%s425 + $0x10] sm:$0xf]
      %v445 = vld [vmem:[%s425 + $0x14] sm:$0xf]
      %v446 = vld [vmem:[%s425 + $0x18] sm:$0xf]
      %v447 = vld [vmem:[%s425 + $0x1c] sm:$0xf]
      %v448 = vld [vmem:[%s431] sm:$0xf]
      %v449 = vld [vmem:[%s431 + $0x4] sm:$0xf]
      %v450 = vld [vmem:[%s431 + $0x8] sm:$0xf]
      %v451 = vld [vmem:[%s431 + $0xc] sm:$0xf]
      %v452 = vld [vmem:[%s431 + $0x10] sm:$0xf]
      %v453 = vld [vmem:[%s431 + $0x14] sm:$0xf]
      %v454 = vld [vmem:[%s431 + $0x18] sm:$0xf]
      %v455 = vld [vmem:[%s431 + $0x1c] sm:$0xf]
      %v456 = vld [vmem:[%s2] sm:$0xf]
      %v457 = vld [vmem:[%s2 + $0x4] sm:$0xf]
      %v458 = vld [vmem:[%s2 + $0x8] sm:$0xf]
      %v467 = vunpack.c.l.b16 %v448
      %v468 = vunpack.c.l.b16 %v449
      %v469 = vunpack.c.l.b16 %v450
      %v470 = vunpack.c.l.b16 %v451
      %v471 = vunpack.c.l.b16 %v452
      %v472 = vunpack.c.l.b16 %v453
      %v473 = vunpack.c.l.b16 %v454
      %v474 = vunpack.c.l.b16 %v455
      %v475 = vpack.c.b16 %v468, %v467
      %v476 = vpack.c.b16 %v470, %v469
      %v477 = vpack.c.b16 %v472, %v471
      %v478 = vpack.c.b16 %v474, %v473
      %v482 = vunpack.c.l.b16 %v456
      %v483 = vunpack.c.l.b16 %v457
      %v484 = vunpack.c.l.b16 %v458
      %v485 = vpack.c.b16 %v483, %v482
      %v486 = vpack.c.b16 %v484, %v484
      %vm488 = vcmask 195584
      %v490 = vsel %vm488, %v475, 0
      %v493 = vsel %vm488, %v476, 0
      %v496 = vsel %vm488, %v477, 0
      %v499 = vsel %vm488, %v478, 0
      %vm501 = vcmask 1043456
      %v503 = vsel %vm501, %v486, 0
      %505 = vmatpush.bf16.msra.mxu0 0
      %506 = vmatpush.bf16.msra.mxu0 0
      %507 = vmatpush.bf16.msra.mxu0 0
      %508 = vmatpush.bf16.msra.mxu0 0
      %509 = vmatpush.bf16.msra.mxu0 0
      %510 = vmatpush.bf16.msra.mxu0 0
      %511 = vmatpush.bf16.msra.mxu0 %v503
      %512 = vmatpush.bf16.msra.mxu0 %v485
      %513 = vmatmul.bf16.gmra.mxu0 %v490
      %v514 = vpop.f32.mrf.mxu0
      %v515 = vadd.f32 0.0, %v514
      %v516 = vpop.f32.mrf.mxu0
      %v517 = vadd.f32 0.0, %v516
      %518 = vmatmul.bf16.gmra.mxu0 %v493
      %v519 = vpop.f32.mrf.mxu0
      %v520 = vadd.f32 0.0, %v519
      %v521 = vpop.f32.mrf.mxu0
      %v522 = vadd.f32 0.0, %v521
      %523 = vmatmul.bf16.gmra.mxu0 %v496
      %v524 = vpop.f32.mrf.mxu0
      %v525 = vadd.f32 0.0, %v524
      %v526 = vpop.f32.mrf.mxu0
      %v527 = vadd.f32 0.0, %v526
      %528 = vmatmul.bf16.gmra.mxu0 %v499
      %v529 = vpop.f32.mrf.mxu0
      %v530 = vadd.f32 0.0, %v529
      %v531 = vpop.f32.mrf.mxu0
      %v532 = vadd.f32 0.0, %v531
      %533 = vdwg.mxu0
      %v534 = vmul.f32 %v515, %v515
      %v535 = vmul.f32 %v517, %v517
      %v536 = vmul.f32 %v520, %v520
      %v537 = vmul.f32 %v522, %v522
      %v538 = vmul.f32 %v525, %v525
      %v539 = vmul.f32 %v527, %v527
      %v540 = vmul.f32 %v530, %v530
      %v541 = vmul.f32 %v532, %v532
      %550 = vrot.lane.b32.xlu0 %v534, 112
      %v551 = vpop.permute.xlu0 %550
      %552 = vrot.lane.b32.xlu0 %v535, 112
      %v553 = vpop.permute.xlu0 %552
      %554 = vrot.lane.b32.xlu0 %v536, 112
      %v555 = vpop.permute.xlu0 %554
      %556 = vrot.lane.b32.xlu0 %v537, 112
      %v557 = vpop.permute.xlu0 %556
      %558 = vrot.lane.b32.xlu0 %v538, 112
      %v559 = vpop.permute.xlu0 %558
      %560 = vrot.lane.b32.xlu0 %v539, 112
      %v561 = vpop.permute.xlu0 %560
      %562 = vrot.lane.b32.xlu0 %v540, 112
      %v563 = vpop.permute.xlu0 %562
      %564 = vrot.lane.b32.xlu0 %v541, 112
      %v565 = vpop.permute.xlu0 %564
      %v574 = vadd.f32 %v534, %v551
      %v575 = vadd.f32 %v535, %v553
      %v576 = vadd.f32 %v536, %v555
      %v577 = vadd.f32 %v537, %v557
      %v578 = vadd.f32 %v538, %v559
      %v579 = vadd.f32 %v539, %v561
      %v580 = vadd.f32 %v540, %v563
      %v581 = vadd.f32 %v541, %v565
      %582 = vrot.lane.b32.xlu0 %v534, 96
      %v583 = vpop.permute.xlu0 %582
      %584 = vrot.lane.b32.xlu0 %v535, 96
      %v585 = vpop.permute.xlu0 %584
      %586 = vrot.lane.b32.xlu0 %v536, 96
      %v587 = vpop.permute.xlu0 %586
      %588 = vrot.lane.b32.xlu0 %v537, 96
      %v589 = vpop.permute.xlu0 %588
      %590 = vrot.lane.b32.xlu0 %v538, 96
      %v591 = vpop.permute.xlu0 %590
      %592 = vrot.lane.b32.xlu0 %v539, 96
      %v593 = vpop.permute.xlu0 %592
      %594 = vrot.lane.b32.xlu0 %v540, 96
      %v595 = vpop.permute.xlu0 %594
      %596 = vrot.lane.b32.xlu0 %v541, 96
      %v597 = vpop.permute.xlu0 %596
      %v606 = vadd.f32 %v574, %v583
      %v607 = vadd.f32 %v575, %v585
      %v608 = vadd.f32 %v576, %v587
      %v609 = vadd.f32 %v577, %v589
      %v610 = vadd.f32 %v578, %v591
      %v611 = vadd.f32 %v579, %v593
      %v612 = vadd.f32 %v580, %v595
      %v613 = vadd.f32 %v581, %v597
      %v614 = vrsqrt.pop %v606
      %v615 = vmul.f32 %v614, %v606
      %v616 = vmul.f32 %v615, %v614
      %v617 = vmul.f32 0.5, %v616
      %v618 = vsub.f32 1.5, %v617
      %v619 = vmul.f32 %v614, %v618
      %v620 = vmul.f32 %v606, %v619
      %vm621 = vcmp.eq.f32.partialorder %v606, inf
      %v622 = vsel %vm621, %v606, %v620
      %vm623 = vcmp.eq.f32.partialorder %v606, 0.0
      %v624 = vand.u32 %v606, 2147483648
      %v625 = vsel %vm623, %v624, %v622
      %v626 = vrsqrt.pop %v607
      %v627 = vmul.f32 %v626, %v607
      %v628 = vmul.f32 %v627, %v626
      %v629 = vmul.f32 0.5, %v628
      %v630 = vsub.f32 1.5, %v629
      %v631 = vmul.f32 %v626, %v630
      %v632 = vmul.f32 %v607, %v631
      %vm633 = vcmp.eq.f32.partialorder %v607, inf
      %v634 = vsel %vm633, %v607, %v632
      %vm635 = vcmp.eq.f32.partialorder %v607, 0.0
      %v636 = vand.u32 %v607, 2147483648
      %v637 = vsel %vm635, %v636, %v634
      %v638 = vrsqrt.pop %v608
      %v639 = vmul.f32 %v638, %v608
      %v640 = vmul.f32 %v639, %v638
      %v641 = vmul.f32 0.5, %v640
      %v642 = vsub.f32 1.5, %v641
      %v643 = vmul.f32 %v638, %v642
      %v644 = vmul.f32 %v608, %v643
      %vm645 = vcmp.eq.f32.partialorder %v608, inf
      %v646 = vsel %vm645, %v608, %v644
      %vm647 = vcmp.eq.f32.partialorder %v608, 0.0
      %v648 = vand.u32 %v608, 2147483648
      %v649 = vsel %vm647, %v648, %v646
      %v650 = vrsqrt.pop %v609
      %v651 = vmul.f32 %v650, %v609
      %v652 = vmul.f32 %v651, %v650
      %v653 = vmul.f32 0.5, %v652
      %v654 = vsub.f32 1.5, %v653
      %v655 = vmul.f32 %v650, %v654
      %v656 = vmul.f32 %v609, %v655
      %vm657 = vcmp.eq.f32.partialorder %v609, inf
      %v658 = vsel %vm657, %v609, %v656
      %vm659 = vcmp.eq.f32.partialorder %v609, 0.0
      %v660 = vand.u32 %v609, 2147483648
      %v661 = vsel %vm659, %v660, %v658
      %v662 = vrsqrt.pop %v610
      %v663 = vmul.f32 %v662, %v610
      %v664 = vmul.f32 %v663, %v662
      %v665 = vmul.f32 0.5, %v664
      %v666 = vsub.f32 1.5, %v665
      %v667 = vmul.f32 %v662, %v666
      %v668 = vmul.f32 %v610, %v667
      %vm669 = vcmp.eq.f32.partialorder %v610, inf
      %v670 = vsel %vm669, %v610, %v668
      %vm671 = vcmp.eq.f32.partialorder %v610, 0.0
      %v672 = vand.u32 %v610, 2147483648
      %v673 = vsel %vm671, %v672, %v670
      %v674 = vrsqrt.pop %v611
      %v675 = vmul.f32 %v674, %v611
      %v676 = vmul.f32 %v675, %v674
      %v677 = vmul.f32 0.5, %v676
      %v678 = vsub.f32 1.5, %v677
      %v679 = vmul.f32 %v674, %v678
      %v680 = vmul.f32 %v611, %v679
      %vm681 = vcmp.eq.f32.partialorder %v611, inf
      %v682 = vsel %vm681, %v611, %v680
      %vm683 = vcmp.eq.f32.partialorder %v611, 0.0
      %v684 = vand.u32 %v611, 2147483648
      %v685 = vsel %vm683, %v684, %v682
      %v686 = vrsqrt.pop %v612
      %v687 = vmul.f32 %v686, %v612
      %v688 = vmul.f32 %v687, %v686
      %v689 = vmul.f32 0.5, %v688
      %v690 = vsub.f32 1.5, %v689
      %v691 = vmul.f32 %v686, %v690
      %v692 = vmul.f32 %v612, %v691
      %vm693 = vcmp.eq.f32.partialorder %v612, inf
      %v694 = vsel %vm693, %v612, %v692
      %vm695 = vcmp.eq.f32.partialorder %v612, 0.0
      %v696 = vand.u32 %v612, 2147483648
      %v697 = vsel %vm695, %v696, %v694
      %v698 = vrsqrt.pop %v613
      %v699 = vmul.f32 %v698, %v613
      %v700 = vmul.f32 %v699, %v698
      %v701 = vmul.f32 0.5, %v700
      %v702 = vsub.f32 1.5, %v701
      %v703 = vmul.f32 %v698, %v702
      %v704 = vmul.f32 %v613, %v703
      %vm705 = vcmp.eq.f32.partialorder %v613, inf
      %v706 = vsel %vm705, %v613, %v704
      %vm707 = vcmp.eq.f32.partialorder %v613, 0.0
      %v708 = vand.u32 %v613, 2147483648
      %v709 = vsel %vm707, %v708, %v706
      %v710 = vpack.c.bf16 %v637, %v625
      %v711 = vpack.c.bf16 %v661, %v649
      %v712 = vpack.c.bf16 %v685, %v673
      %v713 = vpack.c.bf16 %v709, %v697
      %v714 = vld [vmem:[%s4] sm:$0xf]
      %v715 = vld [vmem:[%s4 + $0x4] sm:$0xf]
      %v716 = vld [vmem:[%s5] sm:$0xf]
      %v717 = vld [vmem:[%s5 + $0x4] sm:$0xf]
      %v726 = vunpack.c.l.b16 %v440
      %v727 = vunpack.c.l.b16 %v441
      %v728 = vunpack.c.l.b16 %v442
      %v729 = vunpack.c.l.b16 %v443
      %v730 = vunpack.c.l.b16 %v444
      %v731 = vunpack.c.l.b16 %v445
      %v732 = vunpack.c.l.b16 %v446
      %v733 = vunpack.c.l.b16 %v447
      %v734 = vpack.c.b16 %v727, %v726
      %v735 = vpack.c.b16 %v729, %v728
      %v736 = vpack.c.b16 %v731, %v730
      %v737 = vpack.c.b16 %v733, %v732
      %v740 = vunpack.c.l.b16 %v716
      %v741 = vunpack.c.l.b16 %v717
      %v742 = vpack.c.b16 %v741, %v740
      %vm744 = vcmask 130048
      %v746 = vsel %vm744, %v734, 0
      %v749 = vsel %vm744, %v735, 0
      %v752 = vsel %vm744, %v736, 0
      %v755 = vsel %vm744, %v737, 0
      %757 = vmatpush.bf16.msra.mxu0 0
      %758 = vmatpush.bf16.msra.mxu0 0
      %759 = vmatpush.bf16.msra.mxu0 0
      %760 = vmatpush.bf16.msra.mxu0 0
      %761 = vmatpush.bf16.msra.mxu0 0
      %762 = vmatpush.bf16.msra.mxu0 0
      %763 = vmatpush.bf16.msra.mxu0 0
      %764 = vmatpush.bf16.msra.mxu0 %v742
      %765 = vmatmul.bf16.gmra.mxu0 %v746
      %v766 = vpop.f32.mrf.mxu0
      %v767 = vadd.f32 0.0, %v766
      %v768 = vpop.f32.mrf.mxu0
      %v769 = vadd.f32 0.0, %v768
      %770 = vmatmul.bf16.gmra.mxu0 %v749
      %v771 = vpop.f32.mrf.mxu0
      %v772 = vadd.f32 0.0, %v771
      %v773 = vpop.f32.mrf.mxu0
      %v774 = vadd.f32 0.0, %v773
      %775 = vmatmul.bf16.gmra.mxu0 %v752
      %v776 = vpop.f32.mrf.mxu0
      %v777 = vadd.f32 0.0, %v776
      %v778 = vpop.f32.mrf.mxu0
      %v779 = vadd.f32 0.0, %v778
      %780 = vmatmul.bf16.gmra.mxu0 %v755
      %v781 = vpop.f32.mrf.mxu0
      %v782 = vadd.f32 0.0, %v781
      %v783 = vpop.f32.mrf.mxu0
      %v784 = vadd.f32 0.0, %v783
      %785 = vdwg.mxu0
      %v788 = vunpack.c.l.b16 %v714
      %v789 = vunpack.c.l.b16 %v715
      %v790 = vpack.c.b16 %v789, %v788
      %v793 = vsel %vm744, %v710, 0
      %v796 = vsel %vm744, %v711, 0
      %v799 = vsel %vm744, %v712, 0
      %v802 = vsel %vm744, %v713, 0
      %804 = vmatpush.bf16.msra.mxu0 0
      %805 = vmatpush.bf16.msra.mxu0 0
      %806 = vmatpush.bf16.msra.mxu0 0
      %807 = vmatpush.bf16.msra.mxu0 0
      %808 = vmatpush.bf16.msra.mxu0 0
      %809 = vmatpush.bf16.msra.mxu0 0
      %810 = vmatpush.bf16.msra.mxu0 0
      %811 = vmatpush.bf16.msra.mxu0 %v790
      %812 = vmatmul.bf16.gmra.mxu0 %v793
      %v813 = vpop.f32.mrf.mxu0
      %v814 = vadd.f32 %v767, %v813
      %v815 = vpop.f32.mrf.mxu0
      %v816 = vadd.f32 %v769, %v815
      %817 = vmatmul.bf16.gmra.mxu0 %v796
      %v818 = vpop.f32.mrf.mxu0
      %v819 = vadd.f32 %v772, %v818
      %v820 = vpop.f32.mrf.mxu0
      %v821 = vadd.f32 %v774, %v820
      %822 = vmatmul.bf16.gmra.mxu0 %v799
      %v823 = vpop.f32.mrf.mxu0
      %v824 = vadd.f32 %v777, %v823
      %v825 = vpop.f32.mrf.mxu0
      %v826 = vadd.f32 %v779, %v825
      %827 = vmatmul.bf16.gmra.mxu0 %v802
      %v828 = vpop.f32.mrf.mxu0
      %v829 = vadd.f32 %v782, %v828
      %v830 = vpop.f32.mrf.mxu0
      %v831 = vadd.f32 %v784, %v830
      %832 = vdwg.mxu0
      %v833 = vld [vmem:[%s3] sm:$0xf]
      %v834 = vld [vmem:[%s3 + $0x4] sm:$0xf]
      %v835 = vld [vmem:[%s3 + $0x8] sm:$0xf]
      %v839 = vunpack.c.l.b16 %v833
      %v840 = vunpack.c.l.b16 %v834
      %v841 = vunpack.c.l.b16 %v835
      %v842 = vpack.c.b16 %v840, %v839
      %v843 = vpack.c.b16 %v841, %v841
      %v846 = vsel %vm501, %v843, 0
      %848 = vmatpush.bf16.msra.mxu0 0
      %849 = vmatpush.bf16.msra.mxu0 0
      %850 = vmatpush.bf16.msra.mxu0 0
      %851 = vmatpush.bf16.msra.mxu0 0
      %852 = vmatpush.bf16.msra.mxu0 0
      %853 = vmatpush.bf16.msra.mxu0 0
      %854 = vmatpush.bf16.msra.mxu0 %v846
      %855 = vmatpush.bf16.msra.mxu0 %v842
      %856 = vmatmul.bf16.gmra.mxu0 %v490
      %v857 = vpop.f32.mrf.mxu0
      %v858 = vadd.f32 0.0, %v857
      %v859 = vpop.f32.mrf.mxu0
      %v860 = vadd.f32 0.0, %v859
      %861 = vmatmul.bf16.gmra.mxu0 %v493
      %v862 = vpop.f32.mrf.mxu0
      %v863 = vadd.f32 0.0, %v862
      %v864 = vpop.f32.mrf.mxu0
      %v865 = vadd.f32 0.0, %v864
      %866 = vmatmul.bf16.gmra.mxu0 %v496
      %v867 = vpop.f32.mrf.mxu0
      %v868 = vadd.f32 0.0, %v867
      %v869 = vpop.f32.mrf.mxu0
      %v870 = vadd.f32 0.0, %v869
      %871 = vmatmul.bf16.gmra.mxu0 %v499
      %v872 = vpop.f32.mrf.mxu0
      %v873 = vadd.f32 0.0, %v872
      %v874 = vpop.f32.mrf.mxu0
      %v875 = vadd.f32 0.0, %v874
      %876 = vdwg.mxu0
      %v877 = vpack.c.bf16 %v816, %v814
      %v878 = vpack.c.bf16 %v821, %v819
      %v879 = vpack.c.bf16 %v826, %v824
      %v880 = vpack.c.bf16 %v831, %v829
      %v881 = vld [vmem:[%s6] sm:$0xf]
      %v882 = vld [vmem:[%s6 + $0x4] sm:$0xf]
      %v883 = vld [vmem:[%s6 + $0x8] sm:$0xf]
      %v884 = vld [vmem:[%s6 + $0xc] sm:$0xf]
      %v885 = vld [vmem:[%s7] sm:$0x1]
      %v887 = vperm.slane %v885, 0
      %v893 = vunpack.c.l.b16 %v881
      %v894 = vunpack.c.l.b16 %v882
      %v895 = vunpack.c.l.b16 %v883
      %v896 = vunpack.c.l.b16 %v884
      %v897 = vpack.c.b16 %v894, %v893
      %v898 = vpack.c.b16 %v896, %v895
      %vm901 = vcmask 261120
      %v903 = vsel %vm901, %v877, 0
      %v906 = vsel %vm901, %v878, 0
      %v909 = vsel %vm901, %v879, 0
      %v912 = vsel %vm901, %v880, 0
      %914 = vmatpush.bf16.msra.mxu0 0
      %915 = vmatpush.bf16.msra.mxu0 0
      %916 = vmatpush.bf16.msra.mxu0 0
      %917 = vmatpush.bf16.msra.mxu0 0
      %918 = vmatpush.bf16.msra.mxu0 0
      %919 = vmatpush.bf16.msra.mxu0 0
      %920 = vmatpush.bf16.msra.mxu0 %v898
      %921 = vmatpush.bf16.msra.mxu0 %v897
      %922 = vmatmul.bf16.gmra.mxu0 %v903
      %v923 = vpop.f32.mrf.mxu0
      %v924 = vadd.f32 %v887, %v923
      %v925 = vpop.f32.mrf.mxu0
      %v926 = vadd.f32 %v887, %v925
      %927 = vmatmul.bf16.gmra.mxu0 %v906
      %v928 = vpop.f32.mrf.mxu0
      %v929 = vadd.f32 %v887, %v928
      %v930 = vpop.f32.mrf.mxu0
      %v931 = vadd.f32 %v887, %v930
      %932 = vmatmul.bf16.gmra.mxu0 %v909
      %v933 = vpop.f32.mrf.mxu0
      %v934 = vadd.f32 %v887, %v933
      %v935 = vpop.f32.mrf.mxu0
      %v936 = vadd.f32 %v887, %v935
      %937 = vmatmul.bf16.gmra.mxu0 %v912
      %v938 = vpop.f32.mrf.mxu0
      %v939 = vadd.f32 %v887, %v938
      %v940 = vpop.f32.mrf.mxu0
      %v941 = vadd.f32 %v887, %v940
      %942 = vdwg.mxu0
      %v943 = vxor.u32 %v924, 2147483648
      %v944 = vxor.u32 %v926, 2147483648
      %v945 = vxor.u32 %v929, 2147483648
      %v946 = vxor.u32 %v931, 2147483648
      %v947 = vxor.u32 %v934, 2147483648
      %v948 = vxor.u32 %v936, 2147483648
      %v949 = vxor.u32 %v939, 2147483648
      %v950 = vxor.u32 %v941, 2147483648
      %v951 = vmul.f32 %v943, 1.442695
      %v952 = vpow.pop %v951
      %v953 = vmul.f32 %v944, 1.442695
      %v954 = vpow.pop %v953
      %v955 = vmul.f32 %v945, 1.442695
      %v956 = vpow.pop %v955
      %v957 = vmul.f32 %v946, 1.442695
      %v958 = vpow.pop %v957
      %v959 = vmul.f32 %v947, 1.442695
      %v960 = vpow.pop %v959
      %v961 = vmul.f32 %v948, 1.442695
      %v962 = vpow.pop %v961
      %v963 = vmul.f32 %v949, 1.442695
      %v964 = vpow.pop %v963
      %v965 = vmul.f32 %v950, 1.442695
      %v966 = vpow.pop %v965
      %v967 = vadd.f32 %v952, 1.0
      %v968 = vadd.f32 %v954, 1.0
      %v969 = vadd.f32 %v956, 1.0
      %v970 = vadd.f32 %v958, 1.0
      %v971 = vadd.f32 %v960, 1.0
      %v972 = vadd.f32 %v962, 1.0
      %v973 = vadd.f32 %v964, 1.0
      %v974 = vadd.f32 %v966, 1.0
      %v975 = vrcp.pop %v967
      %v976 = vmul.f32 %v967, %v975
      %v977 = vsub.f32 1.0, %v976
      %v978 = vmul.f32 %v975, %v977
      %v979 = vadd.f32 %v975, %v978
      %vm980 = vweird.f32 %v967
      %vm981 = vweird.f32 %v975
      %vm982 = vmor %vm980, %vm981
      %v983 = vsel %vm982, %v975, %v979
      %v984 = vand.u32 2147483647, %v967
      %vm985 = vcmp.eq.f32.partialorder %v984, 8.507059e+37
      %v986 = vand.u32 %v967, 2147483648
      %v987 = vor.u32 1.1754944e-38, %v986
      %v988 = vsel %vm985, %v987, %v983
      %v989 = vmul.f32 1.0, %v988
      %v990 = vrcp.pop %v968
      %v991 = vmul.f32 %v968, %v990
      %v992 = vsub.f32 1.0, %v991
      %v993 = vmul.f32 %v990, %v992
      %v994 = vadd.f32 %v990, %v993
      %vm995 = vweird.f32 %v968
      %vm996 = vweird.f32 %v990
      %vm997 = vmor %vm995, %vm996
      %v998 = vsel %vm997, %v990, %v994
      %v999 = vand.u32 2147483647, %v968
      %vm1000 = vcmp.eq.f32.partialorder %v999, 8.507059e+37
      %v1001 = vand.u32 %v968, 2147483648
      %v1002 = vor.u32 1.1754944e-38, %v1001
      %v1003 = vsel %vm1000, %v1002, %v998
      %v1004 = vmul.f32 1.0, %v1003
      %v1005 = vrcp.pop %v969
      %v1006 = vmul.f32 %v969, %v1005
      %v1007 = vsub.f32 1.0, %v1006
      %v1008 = vmul.f32 %v1005, %v1007
      %v1009 = vadd.f32 %v1005, %v1008
      %vm1010 = vweird.f32 %v969
      %vm1011 = vweird.f32 %v1005
      %vm1012 = vmor %vm1010, %vm1011
      %v1013 = vsel %vm1012, %v1005, %v1009
      %v1014 = vand.u32 2147483647, %v969
      %vm1015 = vcmp.eq.f32.partialorder %v1014, 8.507059e+37
      %v1016 = vand.u32 %v969, 2147483648
      %v1017 = vor.u32 1.1754944e-38, %v1016
      %v1018 = vsel %vm1015, %v1017, %v1013
      %v1019 = vmul.f32 1.0, %v1018
      %v1020 = vrcp.pop %v970
      %v1021 = vmul.f32 %v970, %v1020
      %v1022 = vsub.f32 1.0, %v1021
      %v1023 = vmul.f32 %v1020, %v1022
      %v1024 = vadd.f32 %v1020, %v1023
      %vm1025 = vweird.f32 %v970
      %vm1026 = vweird.f32 %v1020
      %vm1027 = vmor %vm1025, %vm1026
      %v1028 = vsel %vm1027, %v1020, %v1024
      %v1029 = vand.u32 2147483647, %v970
      %vm1030 = vcmp.eq.f32.partialorder %v1029, 8.507059e+37
      %v1031 = vand.u32 %v970, 2147483648
      %v1032 = vor.u32 1.1754944e-38, %v1031
      %v1033 = vsel %vm1030, %v1032, %v1028
      %v1034 = vmul.f32 1.0, %v1033
      %v1035 = vrcp.pop %v971
      %v1036 = vmul.f32 %v971, %v1035
      %v1037 = vsub.f32 1.0, %v1036
      %v1038 = vmul.f32 %v1035, %v1037
      %v1039 = vadd.f32 %v1035, %v1038
      %vm1040 = vweird.f32 %v971
      %vm1041 = vweird.f32 %v1035
      %vm1042 = vmor %vm1040, %vm1041
      %v1043 = vsel %vm1042, %v1035, %v1039
      %v1044 = vand.u32 2147483647, %v971
      %vm1045 = vcmp.eq.f32.partialorder %v1044, 8.507059e+37
      %v1046 = vand.u32 %v971, 2147483648
      %v1047 = vor.u32 1.1754944e-38, %v1046
      %v1048 = vsel %vm1045, %v1047, %v1043
      %v1049 = vmul.f32 1.0, %v1048
      %v1050 = vrcp.pop %v972
      %v1051 = vmul.f32 %v972, %v1050
      %v1052 = vsub.f32 1.0, %v1051
      %v1053 = vmul.f32 %v1050, %v1052
      %v1054 = vadd.f32 %v1050, %v1053
      %vm1055 = vweird.f32 %v972
      %vm1056 = vweird.f32 %v1050
      %vm1057 = vmor %vm1055, %vm1056
      %v1058 = vsel %vm1057, %v1050, %v1054
      %v1059 = vand.u32 2147483647, %v972
      %vm1060 = vcmp.eq.f32.partialorder %v1059, 8.507059e+37
      %v1061 = vand.u32 %v972, 2147483648
      %v1062 = vor.u32 1.1754944e-38, %v1061
      %v1063 = vsel %vm1060, %v1062, %v1058
      %v1064 = vmul.f32 1.0, %v1063
      %v1065 = vrcp.pop %v973
      %v1066 = vmul.f32 %v973, %v1065
      %v1067 = vsub.f32 1.0, %v1066
      %v1068 = vmul.f32 %v1065, %v1067
      %v1069 = vadd.f32 %v1065, %v1068
      %vm1070 = vweird.f32 %v973
      %vm1071 = vweird.f32 %v1065
      %vm1072 = vmor %vm1070, %vm1071
      %v1073 = vsel %vm1072, %v1065, %v1069
      %v1074 = vand.u32 2147483647, %v973
      %vm1075 = vcmp.eq.f32.partialorder %v1074, 8.507059e+37
      %v1076 = vand.u32 %v973, 2147483648
      %v1077 = vor.u32 1.1754944e-38, %v1076
      %v1078 = vsel %vm1075, %v1077, %v1073
      %v1079 = vmul.f32 1.0, %v1078
      %v1080 = vrcp.pop %v974
      %v1081 = vmul.f32 %v974, %v1080
      %v1082 = vsub.f32 1.0, %v1081
      %v1083 = vmul.f32 %v1080, %v1082
      %v1084 = vadd.f32 %v1080, %v1083
      %vm1085 = vweird.f32 %v974
      %vm1086 = vweird.f32 %v1080
      %vm1087 = vmor %vm1085, %vm1086
      %v1088 = vsel %vm1087, %v1080, %v1084
      %v1089 = vand.u32 2147483647, %v974
      %vm1090 = vcmp.eq.f32.partialorder %v1089, 8.507059e+37
      %v1091 = vand.u32 %v974, 2147483648
      %v1092 = vor.u32 1.1754944e-38, %v1091
      %v1093 = vsel %vm1090, %v1092, %v1088
      %v1094 = vmul.f32 1.0, %v1093
      %v1095 = vmul.f32 %v858, %v989
      %v1096 = vmul.f32 %v860, %v1004
      %v1097 = vmul.f32 %v863, %v1019
      %v1098 = vmul.f32 %v865, %v1034
      %v1099 = vmul.f32 %v868, %v1049
      %v1100 = vmul.f32 %v870, %v1064
      %v1101 = vmul.f32 %v873, %v1079
      %v1102 = vmul.f32 %v875, %v1094
      %v1103 = vpack.c.bf16 %v1096, %v1095
      %v1104 = vpack.c.bf16 %v1098, %v1097
      %v1105 = vpack.c.bf16 %v1100, %v1099
      %v1106 = vpack.c.bf16 %v1102, %v1101
      %v1107 = vld [vmem:[%s8] sm:$0xf]
      %v1108 = vld [vmem:[%s8 + $0x4] sm:$0xf]
      %v1109 = vld [vmem:[%s8 + $0x8] sm:$0xf]
      %v1110 = vld [vmem:[%s8 + $0xc] sm:$0xf]
      %v1111 = vld [vmem:[%s8 + $0x10] sm:$0xf]
      %v1112 = vld [vmem:[%s8 + $0x14] sm:$0xf]
      %v1119 = vunpack.c.l.b16 %v1107
      %v1120 = vunpack.c.l.b16 %v1108
      %v1121 = vunpack.c.l.b16 %v1109
      %v1122 = vunpack.c.l.b16 %v1110
      %v1123 = vunpack.c.l.b16 %v1111
      %v1124 = vunpack.c.l.b16 %v1112
      %v1125 = vpack.c.b16 %v1120, %v1119
      %v1126 = vpack.c.b16 %v1122, %v1121
      %v1127 = vpack.c.b16 %v1124, %v1123
      %vm1131 = vcmask 392192
      %v1133 = vsel %vm1131, %v1103, 0
      %v1136 = vsel %vm1131, %v1104, 0
      %v1139 = vsel %vm1131, %v1105, 0
      %v1142 = vsel %vm1131, %v1106, 0
      %1144 = vmatpush.bf16.msra.mxu0 0
      %1145 = vmatpush.bf16.msra.mxu0 0
      %1146 = vmatpush.bf16.msra.mxu0 0
      %1147 = vmatpush.bf16.msra.mxu0 0
      %1148 = vmatpush.bf16.msra.mxu0 0
      %1149 = vmatpush.bf16.msra.mxu0 %v1127
      %1150 = vmatpush.bf16.msra.mxu0 %v1126
      %1151 = vmatpush.bf16.msra.mxu0 %v1125
      %1152 = vmatmul.bf16.gmra.mxu0 %v1133
      %v1153 = vpop.f32.mrf.mxu0
      %v1154 = vadd.f32 0.0, %v1153
      %v1155 = vpop.f32.mrf.mxu0
      %v1156 = vadd.f32 0.0, %v1155
      %1157 = vmatmul.bf16.gmra.mxu0 %v1136
      %v1158 = vpop.f32.mrf.mxu0
      %v1159 = vadd.f32 0.0, %v1158
      %v1160 = vpop.f32.mrf.mxu0
      %v1161 = vadd.f32 0.0, %v1160
      %1162 = vmatmul.bf16.gmra.mxu0 %v1139
      %v1163 = vpop.f32.mrf.mxu0
      %v1164 = vadd.f32 0.0, %v1163
      %v1165 = vpop.f32.mrf.mxu0
      %v1166 = vadd.f32 0.0, %v1165
      %1167 = vmatmul.bf16.gmra.mxu0 %v1142
      %v1168 = vpop.f32.mrf.mxu0
      %v1169 = vadd.f32 0.0, %v1168
      %v1170 = vpop.f32.mrf.mxu0
      %v1171 = vadd.f32 0.0, %v1170
      %1172 = vdwg.mxu0
      %v1173 = vmul.f32 %v1095, %v1154
      %v1174 = vmul.f32 %v1096, %v1156
      %v1175 = vmul.f32 %v1097, %v1159
      %v1176 = vmul.f32 %v1098, %v1161
      %v1177 = vmul.f32 %v1099, %v1164
      %v1178 = vmul.f32 %v1100, %v1166
      %v1179 = vmul.f32 %v1101, %v1169
      %v1180 = vmul.f32 %v1102, %v1171
      %1189 = vrot.lane.b32.xlu0 %v1173, 112
      %v1190 = vpop.permute.xlu0 %1189
      %1191 = vrot.lane.b32.xlu0 %v1174, 112
      %v1192 = vpop.permute.xlu0 %1191
      %1193 = vrot.lane.b32.xlu0 %v1175, 112
      %v1194 = vpop.permute.xlu0 %1193
      %1195 = vrot.lane.b32.xlu0 %v1176, 112
      %v1196 = vpop.permute.xlu0 %1195
      %1197 = vrot.lane.b32.xlu0 %v1177, 112
      %v1198 = vpop.permute.xlu0 %1197
      %1199 = vrot.lane.b32.xlu0 %v1178, 112
      %v1200 = vpop.permute.xlu0 %1199
      %1201 = vrot.lane.b32.xlu0 %v1179, 112
      %v1202 = vpop.permute.xlu0 %1201
      %1203 = vrot.lane.b32.xlu0 %v1180, 112
      %v1204 = vpop.permute.xlu0 %1203
      %v1213 = vadd.f32 %v1173, %v1190
      %v1214 = vadd.f32 %v1174, %v1192
      %v1215 = vadd.f32 %v1175, %v1194
      %v1216 = vadd.f32 %v1176, %v1196
      %v1217 = vadd.f32 %v1177, %v1198
      %v1218 = vadd.f32 %v1178, %v1200
      %v1219 = vadd.f32 %v1179, %v1202
      %v1220 = vadd.f32 %v1180, %v1204
      %1221 = vrot.lane.b32.xlu0 %v1173, 96
      %v1222 = vpop.permute.xlu0 %1221
      %1223 = vrot.lane.b32.xlu0 %v1174, 96
      %v1224 = vpop.permute.xlu0 %1223
      %1225 = vrot.lane.b32.xlu0 %v1175, 96
      %v1226 = vpop.permute.xlu0 %1225
      %1227 = vrot.lane.b32.xlu0 %v1176, 96
      %v1228 = vpop.permute.xlu0 %1227
      %1229 = vrot.lane.b32.xlu0 %v1177, 96
      %v1230 = vpop.permute.xlu0 %1229
      %1231 = vrot.lane.b32.xlu0 %v1178, 96
      %v1232 = vpop.permute.xlu0 %1231
      %1233 = vrot.lane.b32.xlu0 %v1179, 96
      %v1234 = vpop.permute.xlu0 %1233
      %1235 = vrot.lane.b32.xlu0 %v1180, 96
      %v1236 = vpop.permute.xlu0 %1235
      %v1245 = vadd.f32 %v1213, %v1222
      %v1246 = vadd.f32 %v1214, %v1224
      %v1247 = vadd.f32 %v1215, %v1226
      %v1248 = vadd.f32 %v1216, %v1228
      %v1249 = vadd.f32 %v1217, %v1230
      %v1250 = vadd.f32 %v1218, %v1232
      %v1251 = vadd.f32 %v1219, %v1234
      %v1252 = vadd.f32 %v1220, %v1236
      %v1253 = vmul.f32 %v1154, %v1154
      %v1254 = vmul.f32 %v1156, %v1156
      %v1255 = vmul.f32 %v1159, %v1159
      %v1256 = vmul.f32 %v1161, %v1161
      %v1257 = vmul.f32 %v1164, %v1164
      %v1258 = vmul.f32 %v1166, %v1166
      %v1259 = vmul.f32 %v1169, %v1169
      %v1260 = vmul.f32 %v1171, %v1171
      %1269 = vrot.lane.b32.xlu0 %v1253, 112
      %v1270 = vpop.permute.xlu0 %1269
      %1271 = vrot.lane.b32.xlu0 %v1254, 112
      %v1272 = vpop.permute.xlu0 %1271
      %1273 = vrot.lane.b32.xlu0 %v1255, 112
      %v1274 = vpop.permute.xlu0 %1273
      %1275 = vrot.lane.b32.xlu0 %v1256, 112
      %v1276 = vpop.permute.xlu0 %1275
      %1277 = vrot.lane.b32.xlu0 %v1257, 112
      %v1278 = vpop.permute.xlu0 %1277
      %1279 = vrot.lane.b32.xlu0 %v1258, 112
      %v1280 = vpop.permute.xlu0 %1279
      %1281 = vrot.lane.b32.xlu0 %v1259, 112
      %v1282 = vpop.permute.xlu0 %1281
      %1283 = vrot.lane.b32.xlu0 %v1260, 112
      %v1284 = vpop.permute.xlu0 %1283
      %v1293 = vadd.f32 %v1253, %v1270
      %v1294 = vadd.f32 %v1254, %v1272
      %v1295 = vadd.f32 %v1255, %v1274
      %v1296 = vadd.f32 %v1256, %v1276
      %v1297 = vadd.f32 %v1257, %v1278
      %v1298 = vadd.f32 %v1258, %v1280
      %v1299 = vadd.f32 %v1259, %v1282
      %v1300 = vadd.f32 %v1260, %v1284
      %1301 = vrot.lane.b32.xlu0 %v1253, 96
      %v1302 = vpop.permute.xlu0 %1301
      %1303 = vrot.lane.b32.xlu0 %v1254, 96
      %v1304 = vpop.permute.xlu0 %1303
      %1305 = vrot.lane.b32.xlu0 %v1255, 96
      %v1306 = vpop.permute.xlu0 %1305
      %1307 = vrot.lane.b32.xlu0 %v1256, 96
      %v1308 = vpop.permute.xlu0 %1307
      %1309 = vrot.lane.b32.xlu0 %v1257, 96
      %v1310 = vpop.permute.xlu0 %1309
      %1311 = vrot.lane.b32.xlu0 %v1258, 96
      %v1312 = vpop.permute.xlu0 %1311
      %1313 = vrot.lane.b32.xlu0 %v1259, 96
      %v1314 = vpop.permute.xlu0 %1313
      %1315 = vrot.lane.b32.xlu0 %v1260, 96
      %v1316 = vpop.permute.xlu0 %1315
      %v1325 = vadd.f32 %v1293, %v1302
      %v1326 = vadd.f32 %v1294, %v1304
      %v1327 = vadd.f32 %v1295, %v1306
      %v1328 = vadd.f32 %v1296, %v1308
      %v1329 = vadd.f32 %v1297, %v1310
      %v1330 = vadd.f32 %v1298, %v1312
      %v1331 = vadd.f32 %v1299, %v1314
      %v1332 = vadd.f32 %v1300, %v1316
      %v1333 = vadd.f32 %v1325, 1e-06
      %v1334 = vadd.f32 %v1326, 1e-06
      %v1335 = vadd.f32 %v1327, 1e-06
      %v1336 = vadd.f32 %v1328, 1e-06
      %v1337 = vadd.f32 %v1329, 1e-06
      %v1338 = vadd.f32 %v1330, 1e-06
      %v1339 = vadd.f32 %v1331, 1e-06
      %v1340 = vadd.f32 %v1332, 1e-06
      %v1341 = vrcp.pop %v1333
      %v1342 = vrcp.pop %v1334
      %v1343 = vrcp.pop %v1335
      %v1344 = vrcp.pop %v1336
      %v1345 = vrcp.pop %v1337
      %v1346 = vrcp.pop %v1338
      %v1347 = vrcp.pop %v1339
      %v1348 = vrcp.pop %v1340
      %v1349 = vmul.f32 %v1245, %v1341
      %v1350 = vmul.f32 %v1246, %v1342
      %v1351 = vmul.f32 %v1247, %v1343
      %v1352 = vmul.f32 %v1248, %v1344
      %v1353 = vmul.f32 %v1249, %v1345
      %v1354 = vmul.f32 %v1250, %v1346
      %v1355 = vmul.f32 %v1251, %v1347
      %v1356 = vmul.f32 %v1252, %v1348
      %vm1357 = vcmp.ge.f32.partialorder %v1245, 0.0
      %vm1358 = vcmp.ge.f32.partialorder %v1246, 0.0
      %vm1359 = vcmp.ge.f32.partialorder %v1247, 0.0
      %vm1360 = vcmp.ge.f32.partialorder %v1248, 0.0
      %vm1361 = vcmp.ge.f32.partialorder %v1249, 0.0
      %vm1362 = vcmp.ge.f32.partialorder %v1250, 0.0
      %vm1363 = vcmp.ge.f32.partialorder %v1251, 0.0
      %vm1364 = vcmp.ge.f32.partialorder %v1252, 0.0
      %v1365 = vsel %vm1357, 0.0, %v1349
      %v1366 = vsel %vm1358, 0.0, %v1350
      %v1367 = vsel %vm1359, 0.0, %v1351
      %v1368 = vsel %vm1360, 0.0, %v1352
      %v1369 = vsel %vm1361, 0.0, %v1353
      %v1370 = vsel %vm1362, 0.0, %v1354
      %v1371 = vsel %vm1363, 0.0, %v1355
      %v1372 = vsel %vm1364, 0.0, %v1356
      %v1373 = vmul.f32 %v1365, 0.8
      %v1374 = vmul.f32 %v1366, 0.8
      %v1375 = vmul.f32 %v1367, 0.8
      %v1376 = vmul.f32 %v1368, 0.8
      %v1377 = vmul.f32 %v1369, 0.8
      %v1378 = vmul.f32 %v1370, 0.8
      %v1379 = vmul.f32 %v1371, 0.8
      %v1380 = vmul.f32 %v1372, 0.8
      %1389 = vrot.lane.b32.xlu0 %v1373, 16
      %v1390 = vpop.permute.xlu0 %1389
      %1391 = vrot.lane.b32.xlu0 %v1374, 16
      %v1392 = vpop.permute.xlu0 %1391
      %1393 = vrot.lane.b32.xlu0 %v1375, 16
      %v1394 = vpop.permute.xlu0 %1393
      %1395 = vrot.lane.b32.xlu0 %v1376, 16
      %v1396 = vpop.permute.xlu0 %1395
      %1397 = vrot.lane.b32.xlu0 %v1377, 16
      %v1398 = vpop.permute.xlu0 %1397
      %1399 = vrot.lane.b32.xlu0 %v1378, 16
      %v1400 = vpop.permute.xlu0 %1399
      %1401 = vrot.lane.b32.xlu0 %v1379, 16
      %v1402 = vpop.permute.xlu0 %1401
      %1403 = vrot.lane.b32.xlu0 %v1380, 16
      %v1404 = vpop.permute.xlu0 %1403
      %1413 = vrot.lane.b32.xlu0 %v1373, 32
      %v1414 = vpop.permute.xlu0 %1413
      %1415 = vrot.lane.b32.xlu0 %v1374, 32
      %v1416 = vpop.permute.xlu0 %1415
      %1417 = vrot.lane.b32.xlu0 %v1375, 32
      %v1418 = vpop.permute.xlu0 %1417
      %1419 = vrot.lane.b32.xlu0 %v1376, 32
      %v1420 = vpop.permute.xlu0 %1419
      %1421 = vrot.lane.b32.xlu0 %v1377, 32
      %v1422 = vpop.permute.xlu0 %1421
      %1423 = vrot.lane.b32.xlu0 %v1378, 32
      %v1424 = vpop.permute.xlu0 %1423
      %1425 = vrot.lane.b32.xlu0 %v1379, 32
      %v1426 = vpop.permute.xlu0 %1425
      %1427 = vrot.lane.b32.xlu0 %v1380, 32
      %v1428 = vpop.permute.xlu0 %1427
      %v1437 = vsel %vm744, %v1373, %v1390
      %v1438 = vsel %vm744, %v1374, %v1392
      %v1439 = vsel %vm744, %v1375, %v1394
      %v1440 = vsel %vm744, %v1376, %v1396
      %v1441 = vsel %vm744, %v1377, %v1398
      %v1442 = vsel %vm744, %v1378, %v1400
      %v1443 = vsel %vm744, %v1379, %v1402
      %v1444 = vsel %vm744, %v1380, %v1404
      %v1445 = vsel %vm901, %v1437, %v1414
      %v1446 = vsel %vm901, %v1438, %v1416
      %v1447 = vsel %vm901, %v1439, %v1418
      %v1448 = vsel %vm901, %v1440, %v1420
      %v1449 = vsel %vm901, %v1441, %v1422
      %v1450 = vsel %vm901, %v1442, %v1424
      %v1451 = vsel %vm901, %v1443, %v1426
      %v1452 = vsel %vm901, %v1444, %v1428
      %v1453 = vmul.f32 %v1445, %v1154
      %v1454 = vmul.f32 %v1446, %v1156
      %v1455 = vmul.f32 %v1447, %v1159
      %v1456 = vmul.f32 %v1448, %v1161
      %v1457 = vmul.f32 %v1449, %v1164
      %v1458 = vmul.f32 %v1450, %v1166
      %v1459 = vmul.f32 %v1451, %v1169
      %v1460 = vmul.f32 %v1452, %v1171
      %v1461 = vsub.f32 %v1095, %v1453
      %v1462 = vsub.f32 %v1096, %v1454
      %v1463 = vsub.f32 %v1097, %v1455
      %v1464 = vsub.f32 %v1098, %v1456
      %v1465 = vsub.f32 %v1099, %v1457
      %v1466 = vsub.f32 %v1100, %v1458
      %v1467 = vsub.f32 %v1101, %v1459
      %v1468 = vsub.f32 %v1102, %v1460
      %vm1469 = vcmp.ge.f32.partialorder %v814, 0.0
      %vm1470 = vcmp.ge.f32.partialorder %v816, 0.0
      %vm1471 = vcmp.ge.f32.partialorder %v819, 0.0
      %vm1472 = vcmp.ge.f32.partialorder %v821, 0.0
      %vm1473 = vcmp.ge.f32.partialorder %v824, 0.0
      %vm1474 = vcmp.ge.f32.partialorder %v826, 0.0
      %vm1475 = vcmp.ge.f32.partialorder %v829, 0.0
      %vm1476 = vcmp.ge.f32.partialorder %v831, 0.0
      %v1477 = vmul.f32 %v814, 0.01
      %v1478 = vmul.f32 %v816, 0.01
      %v1479 = vmul.f32 %v819, 0.01
      %v1480 = vmul.f32 %v821, 0.01
      %v1481 = vmul.f32 %v824, 0.01
      %v1482 = vmul.f32 %v826, 0.01
      %v1483 = vmul.f32 %v829, 0.01
      %v1484 = vmul.f32 %v831, 0.01
      %v1485 = vsel %vm1469, %v814, %v1477
      %v1486 = vsel %vm1470, %v816, %v1478
      %v1487 = vsel %vm1471, %v819, %v1479
      %v1488 = vsel %vm1472, %v821, %v1480
      %v1489 = vsel %vm1473, %v824, %v1481
      %v1490 = vsel %vm1474, %v826, %v1482
      %v1491 = vsel %vm1475, %v829, %v1483
      %v1492 = vsel %vm1476, %v831, %v1484
      %v1493 = vpack.c.bf16 %v1462, %v1461
      %v1494 = vpack.c.bf16 %v1464, %v1463
      %v1495 = vpack.c.bf16 %v1466, %v1465
      %v1496 = vpack.c.bf16 %v1468, %v1467
      %v1497 = vld [vmem:[%s9] sm:$0xf]
      %v1498 = vld [vmem:[%s9 + $0x4] sm:$0xf]
      %v1499 = vld [vmem:[%s9 + $0x8] sm:$0xf]
      %v1500 = vld [vmem:[%s9 + $0xc] sm:$0xf]
      %v1501 = vld [vmem:[%s9 + $0x10] sm:$0xf]
      %v1502 = vld [vmem:[%s9 + $0x14] sm:$0xf]
      %v1509 = vunpack.c.l.b16 %v1497
      %v1510 = vunpack.c.l.b16 %v1498
      %v1511 = vunpack.c.l.b16 %v1499
      %v1512 = vunpack.c.l.b16 %v1500
      %v1513 = vunpack.c.l.b16 %v1501
      %v1514 = vunpack.c.l.b16 %v1502
      %v1515 = vpack.c.b16 %v1510, %v1509
      %v1516 = vpack.c.b16 %v1512, %v1511
      %v1517 = vpack.c.b16 %v1514, %v1513
      %v1522 = vsel %vm1131, %v1493, 0
      %v1525 = vsel %vm1131, %v1494, 0
      %v1528 = vsel %vm1131, %v1495, 0
      %v1531 = vsel %vm1131, %v1496, 0
      %1533 = vmatpush.bf16.msra.mxu0 0
      %1534 = vmatpush.bf16.msra.mxu0 0
      %1535 = vmatpush.bf16.msra.mxu0 0
      %1536 = vmatpush.bf16.msra.mxu0 0
      %1537 = vmatpush.bf16.msra.mxu0 0
      %1538 = vmatpush.bf16.msra.mxu0 %v1517
      %1539 = vmatpush.bf16.msra.mxu0 %v1516
      %1540 = vmatpush.bf16.msra.mxu0 %v1515
      %1541 = vmatmul.bf16.gmra.mxu0 %v1522
      %v1542 = vpop.f32.mrf.mxu0
      %v1543 = vadd.f32 0.0, %v1542
      %v1544 = vpop.f32.mrf.mxu0
      %v1545 = vadd.f32 0.0, %v1544
      %1546 = vmatmul.bf16.gmra.mxu0 %v1525
      %v1547 = vpop.f32.mrf.mxu0
      %v1548 = vadd.f32 0.0, %v1547
      %v1549 = vpop.f32.mrf.mxu0
      %v1550 = vadd.f32 0.0, %v1549
      %1551 = vmatmul.bf16.gmra.mxu0 %v1528
      %v1552 = vpop.f32.mrf.mxu0
      %v1553 = vadd.f32 0.0, %v1552
      %v1554 = vpop.f32.mrf.mxu0
      %v1555 = vadd.f32 0.0, %v1554
      %1556 = vmatmul.bf16.gmra.mxu0 %v1531
      %v1557 = vpop.f32.mrf.mxu0
      %v1558 = vadd.f32 0.0, %v1557
      %v1559 = vpop.f32.mrf.mxu0
      %v1560 = vadd.f32 0.0, %v1559
      %1561 = vdwg.mxu0
      %v1562 = vmul.f32 %v1543, %v1543
      %v1563 = vmul.f32 %v1545, %v1545
      %v1564 = vmul.f32 %v1548, %v1548
      %v1565 = vmul.f32 %v1550, %v1550
      %v1566 = vmul.f32 %v1553, %v1553
      %v1567 = vmul.f32 %v1555, %v1555
      %v1568 = vmul.f32 %v1558, %v1558
      %v1569 = vmul.f32 %v1560, %v1560
      %1578 = vrot.lane.b32.xlu0 %v1562, 112
      %v1579 = vpop.permute.xlu0 %1578
      %1580 = vrot.lane.b32.xlu0 %v1563, 112
      %v1581 = vpop.permute.xlu0 %1580
      %1582 = vrot.lane.b32.xlu0 %v1564, 112
      %v1583 = vpop.permute.xlu0 %1582
      %1584 = vrot.lane.b32.xlu0 %v1565, 112
      %v1585 = vpop.permute.xlu0 %1584
      %1586 = vrot.lane.b32.xlu0 %v1566, 112
      %v1587 = vpop.permute.xlu0 %1586
      %1588 = vrot.lane.b32.xlu0 %v1567, 112
      %v1589 = vpop.permute.xlu0 %1588
      %1590 = vrot.lane.b32.xlu0 %v1568, 112
      %v1591 = vpop.permute.xlu0 %1590
      %1592 = vrot.lane.b32.xlu0 %v1569, 112
      %v1593 = vpop.permute.xlu0 %1592
      %v1602 = vadd.f32 %v1562, %v1579
      %v1603 = vadd.f32 %v1563, %v1581
      %v1604 = vadd.f32 %v1564, %v1583
      %v1605 = vadd.f32 %v1565, %v1585
      %v1606 = vadd.f32 %v1566, %v1587
      %v1607 = vadd.f32 %v1567, %v1589
      %v1608 = vadd.f32 %v1568, %v1591
      %v1609 = vadd.f32 %v1569, %v1593
      %1610 = vrot.lane.b32.xlu0 %v1562, 96
      %v1611 = vpop.permute.xlu0 %1610
      %1612 = vrot.lane.b32.xlu0 %v1563, 96
      %v1613 = vpop.permute.xlu0 %1612
      %1614 = vrot.lane.b32.xlu0 %v1564, 96
      %v1615 = vpop.permute.xlu0 %1614
      %1616 = vrot.lane.b32.xlu0 %v1565, 96
      %v1617 = vpop.permute.xlu0 %1616
      %1618 = vrot.lane.b32.xlu0 %v1566, 96
      %v1619 = vpop.permute.xlu0 %1618
      %1620 = vrot.lane.b32.xlu0 %v1567, 96
      %v1621 = vpop.permute.xlu0 %1620
      %1622 = vrot.lane.b32.xlu0 %v1568, 96
      %v1623 = vpop.permute.xlu0 %1622
      %1624 = vrot.lane.b32.xlu0 %v1569, 96
      %v1625 = vpop.permute.xlu0 %1624
      %v1634 = vadd.f32 %v1602, %v1611
      %v1635 = vadd.f32 %v1603, %v1613
      %v1636 = vadd.f32 %v1604, %v1615
      %v1637 = vadd.f32 %v1605, %v1617
      %v1638 = vadd.f32 %v1606, %v1619
      %v1639 = vadd.f32 %v1607, %v1621
      %v1640 = vadd.f32 %v1608, %v1623
      %v1641 = vadd.f32 %v1609, %v1625
      %v1642 = vrsqrt.pop %v1634
      %v1643 = vmul.f32 %v1642, %v1634
      %v1644 = vmul.f32 %v1643, %v1642
      %v1645 = vmul.f32 0.5, %v1644
      %v1646 = vsub.f32 1.5, %v1645
      %v1647 = vmul.f32 %v1642, %v1646
      %v1648 = vmul.f32 %v1634, %v1647
      %vm1649 = vcmp.eq.f32.partialorder %v1634, inf
      %v1650 = vsel %vm1649, %v1634, %v1648
      %vm1651 = vcmp.eq.f32.partialorder %v1634, 0.0
      %v1652 = vand.u32 %v1634, 2147483648
      %v1653 = vsel %vm1651, %v1652, %v1650
      %v1654 = vrsqrt.pop %v1635
      %v1655 = vmul.f32 %v1654, %v1635
      %v1656 = vmul.f32 %v1655, %v1654
      %v1657 = vmul.f32 0.5, %v1656
      %v1658 = vsub.f32 1.5, %v1657
      %v1659 = vmul.f32 %v1654, %v1658
      %v1660 = vmul.f32 %v1635, %v1659
      %vm1661 = vcmp.eq.f32.partialorder %v1635, inf
      %v1662 = vsel %vm1661, %v1635, %v1660
      %vm1663 = vcmp.eq.f32.partialorder %v1635, 0.0
      %v1664 = vand.u32 %v1635, 2147483648
      %v1665 = vsel %vm1663, %v1664, %v1662
      %v1666 = vrsqrt.pop %v1636
      %v1667 = vmul.f32 %v1666, %v1636
      %v1668 = vmul.f32 %v1667, %v1666
      %v1669 = vmul.f32 0.5, %v1668
      %v1670 = vsub.f32 1.5, %v1669
      %v1671 = vmul.f32 %v1666, %v1670
      %v1672 = vmul.f32 %v1636, %v1671
      %vm1673 = vcmp.eq.f32.partialorder %v1636, inf
      %v1674 = vsel %vm1673, %v1636, %v1672
      %vm1675 = vcmp.eq.f32.partialorder %v1636, 0.0
      %v1676 = vand.u32 %v1636, 2147483648
      %v1677 = vsel %vm1675, %v1676, %v1674
      %v1678 = vrsqrt.pop %v1637
      %v1679 = vmul.f32 %v1678, %v1637
      %v1680 = vmul.f32 %v1679, %v1678
      %v1681 = vmul.f32 0.5, %v1680
      %v1682 = vsub.f32 1.5, %v1681
      %v1683 = vmul.f32 %v1678, %v1682
      %v1684 = vmul.f32 %v1637, %v1683
      %vm1685 = vcmp.eq.f32.partialorder %v1637, inf
      %v1686 = vsel %vm1685, %v1637, %v1684
      %vm1687 = vcmp.eq.f32.partialorder %v1637, 0.0
      %v1688 = vand.u32 %v1637, 2147483648
      %v1689 = vsel %vm1687, %v1688, %v1686
      %v1690 = vrsqrt.pop %v1638
      %v1691 = vmul.f32 %v1690, %v1638
      %v1692 = vmul.f32 %v1691, %v1690
      %v1693 = vmul.f32 0.5, %v1692
      %v1694 = vsub.f32 1.5, %v1693
      %v1695 = vmul.f32 %v1690, %v1694
      %v1696 = vmul.f32 %v1638, %v1695
      %vm1697 = vcmp.eq.f32.partialorder %v1638, inf
      %v1698 = vsel %vm1697, %v1638, %v1696
      %vm1699 = vcmp.eq.f32.partialorder %v1638, 0.0
      %v1700 = vand.u32 %v1638, 2147483648
      %v1701 = vsel %vm1699, %v1700, %v1698
      %v1702 = vrsqrt.pop %v1639
      %v1703 = vmul.f32 %v1702, %v1639
      %v1704 = vmul.f32 %v1703, %v1702
      %v1705 = vmul.f32 0.5, %v1704
      %v1706 = vsub.f32 1.5, %v1705
      %v1707 = vmul.f32 %v1702, %v1706
      %v1708 = vmul.f32 %v1639, %v1707
      %vm1709 = vcmp.eq.f32.partialorder %v1639, inf
      %v1710 = vsel %vm1709, %v1639, %v1708
      %vm1711 = vcmp.eq.f32.partialorder %v1639, 0.0
      %v1712 = vand.u32 %v1639, 2147483648
      %v1713 = vsel %vm1711, %v1712, %v1710
      %v1714 = vrsqrt.pop %v1640
      %v1715 = vmul.f32 %v1714, %v1640
      %v1716 = vmul.f32 %v1715, %v1714
      %v1717 = vmul.f32 0.5, %v1716
      %v1718 = vsub.f32 1.5, %v1717
      %v1719 = vmul.f32 %v1714, %v1718
      %v1720 = vmul.f32 %v1640, %v1719
      %vm1721 = vcmp.eq.f32.partialorder %v1640, inf
      %v1722 = vsel %vm1721, %v1640, %v1720
      %vm1723 = vcmp.eq.f32.partialorder %v1640, 0.0
      %v1724 = vand.u32 %v1640, 2147483648
      %v1725 = vsel %vm1723, %v1724, %v1722
      %v1726 = vrsqrt.pop %v1641
      %v1727 = vmul.f32 %v1726, %v1641
      %v1728 = vmul.f32 %v1727, %v1726
      %v1729 = vmul.f32 0.5, %v1728
      %v1730 = vsub.f32 1.5, %v1729
      %v1731 = vmul.f32 %v1726, %v1730
      %v1732 = vmul.f32 %v1641, %v1731
      %vm1733 = vcmp.eq.f32.partialorder %v1641, inf
      %v1734 = vsel %vm1733, %v1641, %v1732
      %vm1735 = vcmp.eq.f32.partialorder %v1641, 0.0
      %v1736 = vand.u32 %v1641, 2147483648
      %v1737 = vsel %vm1735, %v1736, %v1734
      %v1738 = vld [vmem:[%s10] sm:$0xff]
      %v1739 = vld [vmem:[%s10 + $0x8] sm:$0xff]
      %v1740 = vld [vmem:[%s11] sm:$0xff]
      %v1741 = vld [vmem:[%s11 + $0x8] sm:$0xff]
      %v1742 = vld [vmem:[%s11 + $0x10] sm:$0xff]
      %v1743 = vld [vmem:[%s11 + $0x18] sm:$0xff]
      %v1745 = vsel %vm901, %v1485, 0
      %v1748 = vsel %vm901, %v1486, 0
      %v1751 = vsel %vm901, %v1487, 0
      %v1754 = vsel %vm901, %v1488, 0
      %v1757 = vsel %vm901, %v1489, 0
      %v1760 = vsel %vm901, %v1490, 0
      %v1763 = vsel %vm901, %v1491, 0
      %v1766 = vsel %vm901, %v1492, 0
      %1768 = vmatpush.msra.mxu0 0.0
      %1769 = vmatpush.msra.mxu0 0.0
      %1770 = vmatpush.msra.mxu0 0.0
      %1771 = vmatpush.msra.mxu0 0.0
      %1772 = vmatpush.msra.mxu0 0.0
      %1773 = vmatpush.msra.mxu0 0.0
      %1774 = vmatpush.msra.mxu0 0.0
      %1775 = vmatpush.msra.mxu0 0.0
      %1776 = vmatpush.msra.mxu0 0.0
      %1777 = vmatpush.msra.mxu0 0.0
      %1778 = vmatpush.msra.mxu0 0.0
      %1779 = vmatpush.msra.mxu0 0.0
      %1780 = vmatpush.msra.mxu0 %v1743
      %1781 = vmatpush.msra.mxu0 %v1742
      %1782 = vmatpush.msra.mxu0 %v1741
      %1783 = vmatpush.msra.mxu0 %v1740
      %1784 = vmatmul.f32.gmra.mxu0 %v1745
      %v1785 = vpop.f32.mrf.mxu0
      %v1786 = vadd.f32 0.0, %v1785
      %1787 = vmatmul.f32.gmra.mxu0 %v1748
      %v1788 = vpop.f32.mrf.mxu0
      %v1789 = vadd.f32 0.0, %v1788
      %1790 = vmatmul.f32.gmra.mxu0 %v1751
      %v1791 = vpop.f32.mrf.mxu0
      %v1792 = vadd.f32 0.0, %v1791
      %1793 = vmatmul.f32.gmra.mxu0 %v1754
      %v1794 = vpop.f32.mrf.mxu0
      %v1795 = vadd.f32 0.0, %v1794
      %1796 = vmatmul.f32.gmra.mxu0 %v1757
      %v1797 = vpop.f32.mrf.mxu0
      %v1798 = vadd.f32 0.0, %v1797
      %1799 = vmatmul.f32.gmra.mxu0 %v1760
      %v1800 = vpop.f32.mrf.mxu0
      %v1801 = vadd.f32 0.0, %v1800
      %1802 = vmatmul.f32.gmra.mxu0 %v1763
      %v1803 = vpop.f32.mrf.mxu0
      %v1804 = vadd.f32 0.0, %v1803
      %1805 = vmatmul.f32.gmra.mxu0 %v1766
      %v1806 = vpop.f32.mrf.mxu0
      %v1807 = vadd.f32 0.0, %v1806
      %1808 = vdwg.mxu0
      %v1810 = vsel %vm744, %v1653, 0
      %v1813 = vsel %vm744, %v1665, 0
      %v1816 = vsel %vm744, %v1677, 0
      %v1819 = vsel %vm744, %v1689, 0
      %v1822 = vsel %vm744, %v1701, 0
      %v1825 = vsel %vm744, %v1713, 0
      %v1828 = vsel %vm744, %v1725, 0
      %v1831 = vsel %vm744, %v1737, 0
      %1833 = vmatpush.msra.mxu0 0.0
      %1834 = vmatpush.msra.mxu0 0.0
      %1835 = vmatpush.msra.mxu0 0.0
      %1836 = vmatpush.msra.mxu0 0.0
      %1837 = vmatpush.msra.mxu0 0.0
      %1838 = vmatpush.msra.mxu0 0.0
      %1839 = vmatpush.msra.mxu0 0.0
      %1840 = vmatpush.msra.mxu0 0.0
      %1841 = vmatpush.msra.mxu0 0.0
      %1842 = vmatpush.msra.mxu0 0.0
      %1843 = vmatpush.msra.mxu0 0.0
      %1844 = vmatpush.msra.mxu0 0.0
      %1845 = vmatpush.msra.mxu0 0.0
      %1846 = vmatpush.msra.mxu0 0.0
      %1847 = vmatpush.msra.mxu0 %v1739
      %1848 = vmatpush.msra.mxu0 %v1738
      %1849 = vmatmul.f32.gmra.mxu0 %v1810
      %v1850 = vpop.f32.mrf.mxu0
      %v1851 = vadd.f32 %v1786, %v1850
      %1852 = vmatmul.f32.gmra.mxu0 %v1813
      %v1853 = vpop.f32.mrf.mxu0
      %v1854 = vadd.f32 %v1789, %v1853
      %1855 = vmatmul.f32.gmra.mxu0 %v1816
      %v1856 = vpop.f32.mrf.mxu0
      %v1857 = vadd.f32 %v1792, %v1856
      %1858 = vmatmul.f32.gmra.mxu0 %v1819
      %v1859 = vpop.f32.mrf.mxu0
      %v1860 = vadd.f32 %v1795, %v1859
      %1861 = vmatmul.f32.gmra.mxu0 %v1822
      %v1862 = vpop.f32.mrf.mxu0
      %v1863 = vadd.f32 %v1798, %v1862
      %1864 = vmatmul.f32.gmra.mxu0 %v1825
      %v1865 = vpop.f32.mrf.mxu0
      %v1866 = vadd.f32 %v1801, %v1865
      %1867 = vmatmul.f32.gmra.mxu0 %v1828
      %v1868 = vpop.f32.mrf.mxu0
      %v1869 = vadd.f32 %v1804, %v1868
      %1870 = vmatmul.f32.gmra.mxu0 %v1831
      %v1871 = vpop.f32.mrf.mxu0
      %v1872 = vadd.f32 %v1807, %v1871
      %1873 = vdwg.mxu0
      %vm1874 = vcmask 7168
      %1875 = vst.msk [vmem:[%s437] sm:$0xff] %vm1874, %v1851
      %1876 = vst.msk [vmem:[%s437 + $0x8] sm:$0xff] %vm1874, %v1854
      %1877 = vst.msk [vmem:[%s437 + $0x10] sm:$0xff] %vm1874, %v1857
      %1878 = vst.msk [vmem:[%s437 + $0x18] sm:$0xff] %vm1874, %v1860
      %1879 = vst.msk [vmem:[%s437 + $0x20] sm:$0xff] %vm1874, %v1863
      %1880 = vst.msk [vmem:[%s437 + $0x28] sm:$0xff] %vm1874, %v1866
      %1881 = vst.msk [vmem:[%s437 + $0x30] sm:$0xff] %vm1874, %v1869
      %1882 = vst.msk [vmem:[%s437 + $0x38] sm:$0xff] %vm1874, %v1872
      %s1883 = smul.u32 8, %s23
      %p1884 = scmp.lt.s32.totalorder %s1883, 31
      %s1885 = scalar_select %p1884, %s1883, 31
      %s1886 = smul.addr %s1885, 8
      %s1887 = scalar_lea.vmem %s12, %s1886
      // Predicated region
      $region69: #{frontier_layer_vn.1} parent=67 // pred_check
        %p1888 = pneg %p303
      $region70: #{frontier_layer_vn.1} parent=67 // pred_check_branch
        %1890 = sbr.rel (%p1888) target = $region72
      $region71: #{frontier_layer_vn.1} parent=67 // pred_region
        %s1891 = smul.u32 8, %s23
      $region72: #{frontier_layer_vn.1} parent=67 // pred_fallthru
        _
    $region68: #{frontier_layer_vn.1} parent=5 // pred_fallthru
      _
    %p1892 = scmp.le.s32.totalorder 2, %s18
    // Predicated region
    $region73: #{frontier_layer_vn.1} parent=5 // pred_check
      %p1893 = pneg %p1892
    $region74: #{frontier_layer_vn.1} parent=5 // pred_check_branch
      %1895 = sbr.rel (%p1893) target = $region76
    $region75: #{frontier_layer_vn.1} parent=5 // pred_region
      %s1896 = ssub.s32 %s18, 2
      // Predicated region
      $region77: #{frontier_layer_vn.1} parent=75 // pred_check
        %p1897 = pneg %p309
      $region78: #{frontier_layer_vn.1} parent=75 // pred_check_branch
        %1899 = sbr.rel (%p1897) target = $region80
      $region79: #{frontier_layer_vn.1} parent=75 // pred_region
        %s1900 = smul.u32 8, %s24
        %p1901 = scmp.lt.s32.totalorder %s1900, 31
        %s1902 = scalar_select %p1901, %s1900, 31
        %s1903 = smul.addr %s1902, 8
        %s1904 = scalar_lea.vmem %s12, %s1903
      $region80: #{frontier_layer_vn.1} parent=75 // pred_fallthru
        _
    $region76: #{frontier_layer_vn.1} parent=5 // pred_fallthru
      _
  $region6: #{frontier_layer_vn.1} parent=0 // loop_footer
    %s22 = sadd.s32 1, %s18
  $region7: #{frontier_layer_vn.1} parent=0 // loop_footer_branch
    %17 = sbr.rel target = $region3
  $region8: #{frontier_layer_vn.1} parent=0 // loop_exit
    _

</llo_original>
